<compile_context>
chip_gen: v6e
topology: v6e:2x2x1
jax: 0.10.0
libtpu: 0.0.40
codegen_flags: <defaults>
</compile_context>

<pallas_src>
import jax
import jax.numpy as jnp
from jax.experimental import pallas as pl
from jax.experimental.pallas import tpu as pltpu

EMBEDDING_DIM = 768   # Config.EMBEDDING_DIM
HIDDEN_DIM = 512      # Config.HIDDEN_DIM
TILE_N = 2048         # catalog rows per grid step (3 MiB bf16 per buffer)


# --------------------------------------------------------------------------
# Stage 1: mood encoder MLP + L2 normalization of the encoded queries.
# Runs once per call (single block), entirely outside the catalog tile loop.
# --------------------------------------------------------------------------
def _mood_encoder_kernel(mood_ref, w1_ref, b1_ref, w2_ref, b2_ref, enc_ref):
    mood = mood_ref[...]                                                   # (B, D)
    h = jnp.dot(mood, w1_ref[...], preferred_element_type=jnp.float32) + b1_ref[...]
    h = jnp.maximum(h, 0.0)        # ReLU; Dropout(0.3) is identity at inference
    enc = jnp.dot(h, w2_ref[...], preferred_element_type=jnp.float32) + b2_ref[...]  # (B, D)
    # Fold the query-side norm in here: rsqrt goes to the EUP (its own slot).
    inv_norm = jax.lax.rsqrt(
        jnp.maximum(jnp.sum(enc * enc, axis=-1, keepdims=True), 1e-24))    # (B, 1)
    # Output in the catalog's streaming dtype (bf16) so Stage 2 is a native
    # bf16 x bf16 MXU matmul with f32 accumulation.
    enc_ref[...] = (enc * inv_norm).astype(enc_ref.dtype)


# --------------------------------------------------------------------------
# Stage 2: streaming cosine similarity over catalog tiles.
#   - dot_general contracts the feature dims directly (no books.T / XLU work).
#   - inverse book norms are derived from the *resident* tile: ones(1,D) @
#     books**2 on the MXU gives a lane-dense (1, TILE_N) row, then rsqrt (EUP).
#     No second HBM pass over the catalog, no host-side precompute.
#   - All of this per-tile compute (<1 us at B=8) hides under the tile DMA.
# --------------------------------------------------------------------------
def _similarity_kernel(enc_ref, books_ref, out_ref):
    books = books_ref[...]                                                 # (TILE_N, D)
    dots = jax.lax.dot_general(
        enc_ref[...], books,
        dimension_numbers=(((1,), (1,)), ((), ())),
        preferred_element_type=jnp.float32)                                # (B, TILE_N)
    ones_row = jnp.ones((1, books.shape[-1]), dtype=books.dtype)           # (1, D)
    bnorm_sq = jax.lax.dot_general(
        ones_row, books * books,
        dimension_numbers=(((1,), (1,)), ((), ())),
        preferred_element_type=jnp.float32)                                # (1, TILE_N) lane-dense
    inv_bnorm = jax.lax.rsqrt(jnp.maximum(bnorm_sq, 1e-24))
    out_ref[...] = (dots * inv_bnorm).astype(out_ref.dtype)                # lane-dense store


def recommender_forward(mood_embedding, book_embeddings, w1, b1, w2, b2,
                        *, tile_n=TILE_N):
    """mood_embedding: (B, D) f32; book_embeddings: (N, D) f32 or bf16 (bf16
    recommended "at rest" for the static catalog).  Returns (B, N) f32 cosine
    similarities."""
    B, D = mood_embedding.shape
    N = book_embeddings.shape[0]
    H = w1.shape[1]
    stream_dtype = book_embeddings.dtype

    # ---- Stage 1: encode + normalize queries (single tiny block) ----
    enc_n = pl.pallas_call(
        _mood_encoder_kernel,
        out_shape=jax.ShapeDtypeStruct((B, D), stream_dtype),
        grid_spec=pl.GridSpec(
            grid=(1,),
            in_specs=[
                pl.BlockSpec((B, D), lambda i: (0, 0)),
                pl.BlockSpec((D, H), lambda i: (0, 0)),
                pl.BlockSpec((1, H), lambda i: (0, 0)),
                pl.BlockSpec((H, D), lambda i: (0, 0)),
                pl.BlockSpec((1, D), lambda i: (0, 0)),
            ],
            out_specs=pl.BlockSpec((B, D), lambda i: (0, 0)),
        ),
        compiler_params=pltpu.CompilerParams(
            dimension_semantics=("arbitrary",)),
    )(mood_embedding, w1, b1, w2, b2)

    # ---- Stage 2: DMA-pipelined similarity scan over catalog tiles.
    #      No padding: Pallas handles the ragged final block; out-of-range
    #      lanes are never written back (and never read downstream). ----
    n_tiles = pl.cdiv(N, tile_n)
    sims = pl.pallas_call(
        _similarity_kernel,
        out_shape=jax.ShapeDtypeStruct((B, N), jnp.float32),
        grid_spec=pl.GridSpec(
            grid=(n_tiles,),
            in_specs=[
                pl.BlockSpec((B, D), lambda i: (0, 0)),        # normalized queries (resident)
                pl.BlockSpec((tile_n, D), lambda i: (i, 0)),   # streamed catalog tile
            ],
            out_specs=pl.BlockSpec((B, tile_n), lambda i: (0, i)),
        ),
        compiler_params=pltpu.CompilerParams(
            dimension_semantics=("parallel",)),                # 2-TC sharding on v7x
    )(enc_n, book_embeddings)

    return sims


def init_params(key, embedding_dim=EMBEDDING_DIM, hidden_dim=HIDDEN_DIM):
    """Deterministic init mimicking nn.Linear's uniform(-1/sqrt(fan_in), 1/sqrt(fan_in))."""
    k1, k2, k3, k4 = jax.random.split(key, 4)
    bound1 = 1.0 / jnp.sqrt(embedding_dim)
    bound2 = 1.0 / jnp.sqrt(hidden_dim)
    w1 = jax.random.uniform(k1, (embedding_dim, hidden_dim), jnp.float32, -bound1, bound1)
    b1 = jax.random.uniform(k2, (1, hidden_dim), jnp.float32, -bound1, bound1)
    w2 = jax.random.uniform(k3, (hidden_dim, embedding_dim), jnp.float32, -bound2, bound2)
    b2 = jax.random.uniform(k4, (1, embedding_dim), jnp.float32, -bound2, bound2)
    return w1, b1, w2, b2


def reference_forward(mood, books, w1, b1, w2, b2):
    h = jnp.maximum(mood @ w1 + b1, 0.0)
    enc = h @ w2 + b2
    dots = enc @ books.T
    denom = jnp.maximum(
        jnp.linalg.norm(enc, axis=-1, keepdims=True)
        * jnp.linalg.norm(books, axis=-1, keepdims=True).T,
        1e-12,
    )
    return dots / denom


if __name__ == "__main__":
    key = jax.random.PRNGKey(0)
    k_mood, k_books, k_params = jax.random.split(key, 3)

    B = 8      # number of mood queries
    N = 1200   # books in catalog (non-multiple of tile -> exercises ragged last block)
    D = EMBEDDING_DIM

    mood_embedding = jax.random.normal(k_mood, (B, D), jnp.float32)
    book_embeddings = jax.random.normal(k_books, (N, D), jnp.float32)
    w1, b1, w2, b2 = init_params(k_params)

    # Static catalog stored bf16 "at rest" (cast once, outside the forward).
    books_bf16 = book_embeddings.astype(jnp.bfloat16)

    # Small tile for the test (same code path as the production TILE_N=2048).
    sims = recommender_forward(mood_embedding, books_bf16, w1, b1, w2, b2, tile_n=512)
    sims = jax.block_until_ready(sims)

    ref = reference_forward(mood_embedding, book_embeddings, w1, b1, w2, b2)
    assert sims.shape == (B, N)
    # bf16 catalog stream -> relaxed tolerance vs. the f32 reference.
    assert jnp.allclose(sims, ref, atol=1e-2, rtol=1e-2), float(jnp.max(jnp.abs(sims - ref)))

    print("KERNEL_OK")
</pallas_src>

<mosaic_0001>
module attributes {stable_mosaic.version = 11 : i64} {
  func.func @_mood_encoder_kernel(%arg0: i32, %arg1: memref<8x768xf32, #tpu.memory_space<vmem>>, %arg2: memref<768x512xf32, #tpu.memory_space<vmem>>, %arg3: memref<1x512xf32, #tpu.memory_space<vmem>>, %arg4: memref<512x768xf32, #tpu.memory_space<vmem>>, %arg5: memref<1x768xf32, #tpu.memory_space<vmem>>, %arg6: memref<8x768xbf16, #tpu.memory_space<vmem>>) attributes {dimension_semantics = [#tpu.dimension_semantics<arbitrary>], iteration_bounds = array<i64: 1>, scalar_prefetch = 0 : i64, scratch_operands = 0 : i64, tpu.core_type = #tpu.core_type<tc>, window_params = [{pipeline_mode = #tpu.pipeline_mode<synchronous>, transform_indices = @transform_0, window_bounds = array<i64: 8, 768>}, {pipeline_mode = #tpu.pipeline_mode<synchronous>, transform_indices = @transform_1, window_bounds = array<i64: 768, 512>}, {pipeline_mode = #tpu.pipeline_mode<synchronous>, transform_indices = @transform_2, window_bounds = array<i64: 1, 512>}, {pipeline_mode = #tpu.pipeline_mode<synchronous>, transform_indices = @transform_3, window_bounds = array<i64: 512, 768>}, {pipeline_mode = #tpu.pipeline_mode<synchronous>, transform_indices = @transform_4, window_bounds = array<i64: 1, 768>}, {pipeline_mode = #tpu.pipeline_mode<synchronous>, transform_indices = @transform_5, window_bounds = array<i64: 8, 768>}]} {
    %c0 = arith.constant 0 : index
    %c0_0 = arith.constant 0 : index
    %0 = vector.load %arg1[%c0, %c0_0] : memref<8x768xf32, #tpu.memory_space<vmem>>, vector<8x768xf32>
    %c0_1 = arith.constant 0 : index
    %c0_2 = arith.constant 0 : index
    %1 = vector.load %arg2[%c0_1, %c0_2] : memref<768x512xf32, #tpu.memory_space<vmem>>, vector<768x512xf32>
    %cst = arith.constant dense<0.000000e+00> : vector<8x512xf32>
    %2 = tpu.matmul %0, %1, %cst {dimension_numbers = #tpu.dot_dimension_numbers<[1], [0], [0], [1], [0, 0, 1, 1], [], []>} : vector<8x768xf32>, vector<768x512xf32>, vector<8x512xf32> -> vector<8x512xf32>
    %c0_3 = arith.constant 0 : index
    %c0_4 = arith.constant 0 : index
    %3 = vector.load %arg3[%c0_3, %c0_4] : memref<1x512xf32, #tpu.memory_space<vmem>>, vector<1x512xf32>
    %4 = vector.broadcast %3 : vector<1x512xf32> to vector<8x512xf32>
    %5 = arith.addf %2, %4 : vector<8x512xf32>
    %cst_5 = arith.constant 0.000000e+00 : f32
    %6 = vector.broadcast %cst_5 : f32 to vector<8x512xf32>
    %7 = arith.maximumf %5, %6 : vector<8x512xf32>
    %c0_6 = arith.constant 0 : index
    %c0_7 = arith.constant 0 : index
    %8 = vector.load %arg4[%c0_6, %c0_7] : memref<512x768xf32, #tpu.memory_space<vmem>>, vector<512x768xf32>
    %cst_8 = arith.constant dense<0.000000e+00> : vector<8x768xf32>
    %9 = tpu.matmul %7, %8, %cst_8 {dimension_numbers = #tpu.dot_dimension_numbers<[1], [0], [0], [1], [0, 0, 1, 1], [], []>} : vector<8x512xf32>, vector<512x768xf32>, vector<8x768xf32> -> vector<8x768xf32>
    %c0_9 = arith.constant 0 : index
    %c0_10 = arith.constant 0 : index
    %10 = vector.load %arg5[%c0_9, %c0_10] : memref<1x768xf32, #tpu.memory_space<vmem>>, vector<1x768xf32>
    %11 = vector.broadcast %10 : vector<1x768xf32> to vector<8x768xf32>
    %12 = arith.addf %9, %11 : vector<8x768xf32>
    %13 = arith.mulf %12, %12 : vector<8x768xf32>
    %cst_11 = arith.constant dense<0.000000e+00> : vector<8xf32>
    %14 = vector.multi_reduction <add>, %13, %cst_11 [1] : vector<8x768xf32> to vector<8xf32>
    %15 = vector.shape_cast %14 : vector<8xf32> to vector<8x1xf32>
    %cst_12 = arith.constant 1.000000e-24 : f32
    %16 = vector.broadcast %cst_12 : f32 to vector<8x1xf32>
    %17 = arith.maximumf %15, %16 : vector<8x1xf32>
    %18 = math.rsqrt %17 : vector<8x1xf32>
    %19 = vector.broadcast %18 : vector<8x1xf32> to vector<8x768xf32>
    %20 = arith.mulf %12, %19 : vector<8x768xf32>
    %21 = arith.truncf %20 : vector<8x768xf32> to vector<8x768xbf16>
    %c0_13 = arith.constant 0 : index
    %c0_14 = arith.constant 0 : index
    %22 = vector.load %arg6[%c0_13, %c0_14] : memref<8x768xbf16, #tpu.memory_space<vmem>>, vector<8x768xbf16>
    tpu.vector_store %arg6[%c0_13, %c0_14], %21 {strides = array<i32>} : memref<8x768xbf16, #tpu.memory_space<vmem>>, vector<8x768xbf16>,
    return
  }
  func.func @transform_0(%arg0: i32) -> (i32, i32) {
    %c0_i32 = arith.constant 0 : i32
    %c0_i32_0 = arith.constant 0 : i32
    %c0_i32_1 = arith.constant 0 : i32
    return %c0_i32, %c0_i32_0 : i32, i32
  }
  func.func @transform_1(%arg0: i32) -> (i32, i32) {
    %c0_i32 = arith.constant 0 : i32
    %c0_i32_0 = arith.constant 0 : i32
    %c0_i32_1 = arith.constant 0 : i32
    return %c0_i32, %c0_i32_0 : i32, i32
  }
  func.func @transform_2(%arg0: i32) -> (i32, i32) {
    %c0_i32 = arith.constant 0 : i32
    %c0_i32_0 = arith.constant 0 : i32
    %c0_i32_1 = arith.constant 0 : i32
    return %c0_i32, %c0_i32_0 : i32, i32
  }
  func.func @transform_3(%arg0: i32) -> (i32, i32) {
    %c0_i32 = arith.constant 0 : i32
    %c0_i32_0 = arith.constant 0 : i32
    %c0_i32_1 = arith.constant 0 : i32
    return %c0_i32, %c0_i32_0 : i32, i32
  }
  func.func @transform_4(%arg0: i32) -> (i32, i32) {
    %c0_i32 = arith.constant 0 : i32
    %c0_i32_0 = arith.constant 0 : i32
    %c0_i32_1 = arith.constant 0 : i32
    return %c0_i32, %c0_i32_0 : i32, i32
  }
  func.func @transform_5(%arg0: i32) -> (i32, i32) {
    %c0_i32 = arith.constant 0 : i32
    %c0_i32_0 = arith.constant 0 : i32
    %c0_i32_1 = arith.constant 0 : i32
    return %c0_i32, %c0_i32_0 : i32, i32
  }
}

</mosaic_0001>

<llo_original>
// kernel: tpu_custom_call.1
$region0: #{tpu_custom_call.1}
  #allocation0 [shape = 'u32[]', space=smem, size = 0x4, offset = 0x4, fixed_abs, tag = 'smem constant byte address 0x4 - core index']
  #allocation1 [shape = 'u32[144,128]{1,0:T(1,128)}', space=vmem, size = 0x12000, scoped, tag = 'internal scratch']
  %s0 = inlined_call_operand.hbm [shape: f32[8,768], index: 0, kind: input, shape index: {}]
  %s1 = inlined_call_operand.hbm [shape: f32[768,512], index: 1, kind: input, shape index: {}]
  %s2 = inlined_call_operand.hbm [shape: f32[1,512], index: 2, kind: input, shape index: {}]
  %s3 = inlined_call_operand.hbm [shape: f32[512,768], index: 3, kind: input, shape index: {}]
  %s4 = inlined_call_operand.hbm [shape: f32[1,768], index: 4, kind: input, shape index: {}]
  %s5 = inlined_call_operand.hbm [shape: bf16[8,768], index: 5, kind: output, shape index: {}]
  %s6 = sld [smem:[#allocation0]]
  $region50: #{tpu_custom_call.1} parent=0
    _
  %s8 = ssub.s32 1, %s6
  %s9 = scalar_select 0, %s8, %s6
  $region1: #{tpu_custom_call.1} parent=0
    #allocation2 [shape = 'u8[24576]{0}', space=vmem, size = 0x6000, scoped, tag = 'input window, operand 0, single buffered']
    #allocation3 [shape = 's32[1]{0}', space=sflag, size = 0x4, scoped, tag = 'scoped memory for tpu_custom_call.1']
    #allocation4 [shape = 's32[1]{0}', space=sflag, size = 0x4, scoped, tag = 'scoped memory for tpu_custom_call.1']
    #allocation5 [shape = 'u8[1572864]{0}', space=vmem, size = 0x180000, scoped, tag = 'input window, operand 1, single buffered']
    #allocation6 [shape = 's32[1]{0}', space=sflag, size = 0x4, scoped, tag = 'scoped memory for tpu_custom_call.1']
    #allocation7 [shape = 'u8[2048]{0}', space=vmem, size = 0x800, scoped, tag = 'input window, operand 2, single buffered']
    #allocation8 [shape = 'u8[1572864]{0}', space=vmem, size = 0x180000, scoped, tag = 'input window, operand 3, single buffered']
    #allocation9 [shape = 's32[1]{0}', space=sflag, size = 0x4, scoped, tag = 'scoped memory for tpu_custom_call.1']
    #allocation10 [shape = 'u8[3072]{0}', space=vmem, size = 0xc00, scoped, tag = 'input window, operand 4, single buffered']
    #allocation11 [shape = 'u8[12288]{0}', space=vmem, size = 0x3000, scoped, tag = 'output window, operand 0, single buffered']
    %10 = vsyncpa [#allocation3], 0
    %11 = vsyncpa [#allocation6], 0
    %12 = vsyncpa [#allocation9], 0
    %13 = vsyncpa [#allocation4], 0
    // Predicated region
    $region2: #{tpu_custom_call.1} parent=1 // pred_check
      _
    $region3: #{tpu_custom_call.1} parent=1 // pred_check_branch
      %15 = sbr.rel (0) target = $region5
    $region4: #{tpu_custom_call.1} parent=1 // pred_region
      %s17 = ssub.s32 768, 768
      %18 = vsyncadd [#allocation3], %s17
      %s20 = sshll.u32 [#allocation2], 4
      %s21 = int_to_ptr.vmem [resolvable:$true] %s20
      %23 = dma.hbm_to_vmem [thread:$0]  %s0, 768, %s21, [#allocation3]
    $region5: #{tpu_custom_call.1} parent=1 // pred_fallthru
      _
    // Predicated region
    $region6: #{tpu_custom_call.1} parent=1 // pred_check
      _
    $region7: #{tpu_custom_call.1} parent=1 // pred_check_branch
      %25 = sbr.rel (0) target = $region9
    $region8: #{tpu_custom_call.1} parent=1 // pred_region
      %s27 = ssub.s32 49152, 49152
      %28 = vsyncadd [#allocation6], %s27
      %s29 = sshll.u32 [#allocation5], 4
      %s30 = int_to_ptr.vmem [resolvable:$true] %s29
      %35 = dma.hbm_to_vmem [thread:$0]  %s1, 49152, %s30, [#allocation6], 512, 512, 32
    $region9: #{tpu_custom_call.1} parent=1 // pred_fallthru
      _
    // Predicated region
    $region10: #{tpu_custom_call.1} parent=1 // pred_check
      _
    $region11: #{tpu_custom_call.1} parent=1 // pred_check_branch
      %37 = sbr.rel (0) target = $region13
    $region12: #{tpu_custom_call.1} parent=1 // pred_region
      %s39 = ssub.s32 64, 64
      %40 = vsyncadd [#allocation6], %s39
      %s42 = sshll.u32 [#allocation7], 4
      %s43 = int_to_ptr.vmem [resolvable:$true] %s42
      %45 = dma.hbm_to_vmem [thread:$0]  %s2, 64, %s43, [#allocation6]
    $region13: #{tpu_custom_call.1} parent=1 // pred_fallthru
      _
    // Predicated region
    $region14: #{tpu_custom_call.1} parent=1 // pred_check
      _
    $region15: #{tpu_custom_call.1} parent=1 // pred_check_branch
      %47 = sbr.rel (0) target = $region17
    $region16: #{tpu_custom_call.1} parent=1 // pred_region
      %s49 = ssub.s32 49152, 49152
      %50 = vsyncadd [#allocation9], %s49
      %s51 = sshll.u32 [#allocation8], 4
      %s52 = int_to_ptr.vmem [resolvable:$true] %s51
      %57 = dma.hbm_to_vmem [thread:$0]  %s3, 49152, %s52, [#allocation9], 768, 768, 48
    $region17: #{tpu_custom_call.1} parent=1 // pred_fallthru
      _
    // Predicated region
    $region18: #{tpu_custom_call.1} parent=1 // pred_check
      _
    $region19: #{tpu_custom_call.1} parent=1 // pred_check_branch
      %59 = sbr.rel (0) target = $region21
    $region20: #{tpu_custom_call.1} parent=1 // pred_region
      %s61 = ssub.s32 96, 96
      %62 = vsyncadd [#allocation9], %s61
      %s64 = sshll.u32 [#allocation10], 4
      %s65 = int_to_ptr.vmem [resolvable:$true] %s64
      %67 = dma.hbm_to_vmem [thread:$0]  %s4, 96, %s65, [#allocation9]
    $region21: #{tpu_custom_call.1} parent=1 // pred_fallthru
      _
    // Predicated region
    $region22: #{tpu_custom_call.1} parent=1 // pred_check
      _
    $region23: #{tpu_custom_call.1} parent=1 // pred_check_branch
      %69 = sbr.rel (0) target = $region25
    $region24: #{tpu_custom_call.1} parent=1 // pred_region
      %70 = dma.done [#allocation3], 768
    $region25: #{tpu_custom_call.1} parent=1 // pred_fallthru
      _
    // Predicated region
    $region26: #{tpu_custom_call.1} parent=1 // pred_check
      _
    $region27: #{tpu_custom_call.1} parent=1 // pred_check_branch
      %72 = sbr.rel (0) target = $region29
    $region28: #{tpu_custom_call.1} parent=1 // pred_region
      %73 = dma.done [#allocation6], 49152
    $region29: #{tpu_custom_call.1} parent=1 // pred_fallthru
      _
    // Predicated region
    $region30: #{tpu_custom_call.1} parent=1 // pred_check
      _
    $region31: #{tpu_custom_call.1} parent=1 // pred_check_branch
      %75 = sbr.rel (0) target = $region33
    $region32: #{tpu_custom_call.1} parent=1 // pred_region
      %76 = dma.done [#allocation6], 64
    $region33: #{tpu_custom_call.1} parent=1 // pred_fallthru
      _
    // Predicated region
    $region34: #{tpu_custom_call.1} parent=1 // pred_check
      _
    $region35: #{tpu_custom_call.1} parent=1 // pred_check_branch
      %78 = sbr.rel (0) target = $region37
    $region36: #{tpu_custom_call.1} parent=1 // pred_region
      %79 = dma.done [#allocation9], 49152
    $region37: #{tpu_custom_call.1} parent=1 // pred_fallthru
      _
    // Predicated region
    $region38: #{tpu_custom_call.1} parent=1 // pred_check
      _
    $region39: #{tpu_custom_call.1} parent=1 // pred_check_branch
      %81 = sbr.rel (0) target = $region41
    $region40: #{tpu_custom_call.1} parent=1 // pred_region
      %82 = dma.done [#allocation9], 96
    $region41: #{tpu_custom_call.1} parent=1 // pred_fallthru
      _
    %v83 = vld [vmem:[#allocation2] sm:$0xff]
    %v84 = vld [vmem:[#allocation2 + $0x8] sm:$0xff]
    %v85 = vld [vmem:[#allocation2 + $0x10] sm:$0xff]
    %v86 = vld [vmem:[#allocation2 + $0x18] sm:$0xff]
    %v87 = vld [vmem:[#allocation2 + $0x20] sm:$0xff]
    %v88 = vld [vmem:[#allocation2 + $0x28] sm:$0xff]
    %v89 = vld [vmem:[#allocation5] sm:$0xff]
    %v90 = vld [vmem:[#allocation5 + $0x8] sm:$0xff]
    %v91 = vld [vmem:[#allocation5 + $0x10] sm:$0xff]
    %v92 = vld [vmem:[#allocation5 + $0x18] sm:$0xff]
    %v93 = vld [vmem:[#allocation5 + $0x20] sm:$0xff]
    %v94 = vld [vmem:[#allocation5 + $0x28] sm:$0xff]
    %v95 = vld [vmem:[#allocation5 + $0x30] sm:$0xff]
    %v96 = vld [vmem:[#allocation5 + $0x38] sm:$0xff]
    %v97 = vld [vmem:[#allocation5 + $0x40] sm:$0xff]
    %v98 = vld [vmem:[#allocation5 + $0x48] sm:$0xff]
    %v99 = vld [vmem:[#allocation5 + $0x50] sm:$0xff]
    %v100 = vld [vmem:[#allocation5 + $0x58] sm:$0xff]
    %v101 = vld [vmem:[#allocation5 + $0x60] sm:$0xff]
    %v102 = vld [vmem:[#allocation5 + $0x68] sm:$0xff]
    %v103 = vld [vmem:[#allocation5 + $0x70] sm:$0xff]
    %v104 = vld [vmem:[#allocation5 + $0x78] sm:$0xff]
    %v105 = vld [vmem:[#allocation5 + $0x80] sm:$0xff]
    %v106 = vld [vmem:[#allocation5 + $0x88] sm:$0xff]
    %v107 = vld [vmem:[#allocation5 + $0x90] sm:$0xff]
    %v108 = vld [vmem:[#allocation5 + $0x98] sm:$0xff]
    %v109 = vld [vmem:[#allocation5 + $0xa0] sm:$0xff]
    %v110 = vld [vmem:[#allocation5 + $0xa8] sm:$0xff]
    %v111 = vld [vmem:[#allocation5 + $0xb0] sm:$0xff]
    %v112 = vld [vmem:[#allocation5 + $0xb8] sm:$0xff]
    %v113 = vld [vmem:[#allocation5 + $0xc0] sm:$0xff]
    %v114 = vld [vmem:[#allocation5 + $0xc8] sm:$0xff]
    %v115 = vld [vmem:[#allocation5 + $0xd0] sm:$0xff]
    %v116 = vld [vmem:[#allocation5 + $0xd8] sm:$0xff]
    %v117 = vld [vmem:[#allocation5 + $0xe0] sm:$0xff]
    %v118 = vld [vmem:[#allocation5 + $0xe8] sm:$0xff]
    %v119 = vld [vmem:[#allocation5 + $0xf0] sm:$0xff]
    %v120 = vld [vmem:[#allocation5 + $0xf8] sm:$0xff]
    %v121 = vld [vmem:[#allocation5 + $0x100] sm:$0xff]
    %v122 = vld [vmem:[#allocation5 + $0x108] sm:$0xff]
    %v123 = vld [vmem:[#allocation5 + $0x110] sm:$0xff]
    %v124 = vld [vmem:[#allocation5 + $0x118] sm:$0xff]
    %v125 = vld [vmem:[#allocation5 + $0x120] sm:$0xff]
    %v126 = vld [vmem:[#allocation5 + $0x128] sm:$0xff]
    %v127 = vld [vmem:[#allocation5 + $0x130] sm:$0xff]
    %v128 = vld [vmem:[#allocation5 + $0x138] sm:$0xff]
    %v129 = vld [vmem:[#allocation5 + $0x140] sm:$0xff]
    %v130 = vld [vmem:[#allocation5 + $0x148] sm:$0xff]
    %v131 = vld [vmem:[#allocation5 + $0x150] sm:$0xff]
    %v132 = vld [vmem:[#allocation5 + $0x158] sm:$0xff]
    %v133 = vld [vmem:[#allocation5 + $0x160] sm:$0xff]
    %v134 = vld [vmem:[#allocation5 + $0x168] sm:$0xff]
    %v135 = vld [vmem:[#allocation5 + $0x170] sm:$0xff]
    %v136 = vld [vmem:[#allocation5 + $0x178] sm:$0xff]
    %v137 = vld [vmem:[#allocation5 + $0x180] sm:$0xff]
    %v138 = vld [vmem:[#allocation5 + $0x188] sm:$0xff]
    %v139 = vld [vmem:[#allocation5 + $0x190] sm:$0xff]
    %v140 = vld [vmem:[#allocation5 + $0x198] sm:$0xff]
    %v141 = vld [vmem:[#allocation5 + $0x1a0] sm:$0xff]
    %v142 = vld [vmem:[#allocation5 + $0x1a8] sm:$0xff]
    %v143 = vld [vmem:[#allocation5 + $0x1b0] sm:$0xff]
    %v144 = vld [vmem:[#allocation5 + $0x1b8] sm:$0xff]
    %v145 = vld [vmem:[#allocation5 + $0x1c0] sm:$0xff]
    %v146 = vld [vmem:[#allocation5 + $0x1c8] sm:$0xff]
    %v147 = vld [vmem:[#allocation5 + $0x1d0] sm:$0xff]
    %v148 = vld [vmem:[#allocation5 + $0x1d8] sm:$0xff]
    %v149 = vld [vmem:[#allocation5 + $0x1e0] sm:$0xff]
    %v150 = vld [vmem:[#allocation5 + $0x1e8] sm:$0xff]
    %v151 = vld [vmem:[#allocation5 + $0x1f0] sm:$0xff]
    %v152 = vld [vmem:[#allocation5 + $0x1f8] sm:$0xff]
    %v153 = vld [vmem:[#allocation5 + $0x200] sm:$0xff]
    %v154 = vld [vmem:[#allocation5 + $0x208] sm:$0xff]
    %v155 = vld [vmem:[#allocation5 + $0x210] sm:$0xff]
    %v156 = vld [vmem:[#allocation5 + $0x218] sm:$0xff]
    %v157 = vld [vmem:[#allocation5 + $0x220] sm:$0xff]
    %v158 = vld [vmem:[#allocation5 + $0x228] sm:$0xff]
    %v159 = vld [vmem:[#allocation5 + $0x230] sm:$0xff]
    %v160 = vld [vmem:[#allocation5 + $0x238] sm:$0xff]
    %v161 = vld [vmem:[#allocation5 + $0x240] sm:$0xff]
    %v162 = vld [vmem:[#allocation5 + $0x248] sm:$0xff]
    %v163 = vld [vmem:[#allocation5 + $0x250] sm:$0xff]
    %v164 = vld [vmem:[#allocation5 + $0x258] sm:$0xff]
    %v165 = vld [vmem:[#allocation5 + $0x260] sm:$0xff]
    %v166 = vld [vmem:[#allocation5 + $0x268] sm:$0xff]
    %v167 = vld [vmem:[#allocation5 + $0x270] sm:$0xff]
    %v168 = vld [vmem:[#allocation5 + $0x278] sm:$0xff]
    %v169 = vld [vmem:[#allocation5 + $0x280] sm:$0xff]
    %v170 = vld [vmem:[#allocation5 + $0x288] sm:$0xff]
    %v171 = vld [vmem:[#allocation5 + $0x290] sm:$0xff]
    %v172 = vld [vmem:[#allocation5 + $0x298] sm:$0xff]
    %v173 = vld [vmem:[#allocation5 + $0x2a0] sm:$0xff]
    %v174 = vld [vmem:[#allocation5 + $0x2a8] sm:$0xff]
    %v175 = vld [vmem:[#allocation5 + $0x2b0] sm:$0xff]
    %v176 = vld [vmem:[#allocation5 + $0x2b8] sm:$0xff]
    %v177 = vld [vmem:[#allocation5 + $0x2c0] sm:$0xff]
    %v178 = vld [vmem:[#allocation5 + $0x2c8] sm:$0xff]
    %v179 = vld [vmem:[#allocation5 + $0x2d0] sm:$0xff]
    %v180 = vld [vmem:[#allocation5 + $0x2d8] sm:$0xff]
    %v181 = vld [vmem:[#allocation5 + $0x2e0] sm:$0xff]
    %v182 = vld [vmem:[#allocation5 + $0x2e8] sm:$0xff]
    %v183 = vld [vmem:[#allocation5 + $0x2f0] sm:$0xff]
    %v184 = vld [vmem:[#allocation5 + $0x2f8] sm:$0xff]
    %v185 = vld [vmem:[#allocation5 + $0x300] sm:$0xff]
    %v186 = vld [vmem:[#allocation5 + $0x308] sm:$0xff]
    %v187 = vld [vmem:[#allocation5 + $0x310] sm:$0xff]
    %v188 = vld [vmem:[#allocation5 + $0x318] sm:$0xff]
    %v189 = vld [vmem:[#allocation5 + $0x320] sm:$0xff]
    %v190 = vld [vmem:[#allocation5 + $0x328] sm:$0xff]
    %v191 = vld [vmem:[#allocation5 + $0x330] sm:$0xff]
    %v192 = vld [vmem:[#allocation5 + $0x338] sm:$0xff]
    %v193 = vld [vmem:[#allocation5 + $0x340] sm:$0xff]
    %v194 = vld [vmem:[#allocation5 + $0x348] sm:$0xff]
    %v195 = vld [vmem:[#allocation5 + $0x350] sm:$0xff]
    %v196 = vld [vmem:[#allocation5 + $0x358] sm:$0xff]
    %v197 = vld [vmem:[#allocation5 + $0x360] sm:$0xff]
    %v198 = vld [vmem:[#allocation5 + $0x368] sm:$0xff]
    %v199 = vld [vmem:[#allocation5 + $0x370] sm:$0xff]
    %v200 = vld [vmem:[#allocation5 + $0x378] sm:$0xff]
    %v201 = vld [vmem:[#allocation5 + $0x380] sm:$0xff]
    %v202 = vld [vmem:[#allocation5 + $0x388] sm:$0xff]
    %v203 = vld [vmem:[#allocation5 + $0x390] sm:$0xff]
    %v204 = vld [vmem:[#allocation5 + $0x398] sm:$0xff]
    %v205 = vld [vmem:[#allocation5 + $0x3a0] sm:$0xff]
    %v206 = vld [vmem:[#allocation5 + $0x3a8] sm:$0xff]
    %v207 = vld [vmem:[#allocation5 + $0x3b0] sm:$0xff]
    %v208 = vld [vmem:[#allocation5 + $0x3b8] sm:$0xff]
    %v209 = vld [vmem:[#allocation5 + $0x3c0] sm:$0xff]
    %v210 = vld [vmem:[#allocation5 + $0x3c8] sm:$0xff]
    %v211 = vld [vmem:[#allocation5 + $0x3d0] sm:$0xff]
    %v212 = vld [vmem:[#allocation5 + $0x3d8] sm:$0xff]
    %v213 = vld [vmem:[#allocation5 + $0x3e0] sm:$0xff]
    %v214 = vld [vmem:[#allocation5 + $0x3e8] sm:$0xff]
    %v215 = vld [vmem:[#allocation5 + $0x3f0] sm:$0xff]
    %v216 = vld [vmem:[#allocation5 + $0x3f8] sm:$0xff]
    %v217 = vld [vmem:[#allocation5 + $0x400] sm:$0xff]
    %v218 = vld [vmem:[#allocation5 + $0x408] sm:$0xff]
    %v219 = vld [vmem:[#allocation5 + $0x410] sm:$0xff]
    %v220 = vld [vmem:[#allocation5 + $0x418] sm:$0xff]
    %v221 = vld [vmem:[#allocation5 + $0x420] sm:$0xff]
    %v222 = vld [vmem:[#allocation5 + $0x428] sm:$0xff]
    %v223 = vld [vmem:[#allocation5 + $0x430] sm:$0xff]
    %v224 = vld [vmem:[#allocation5 + $0x438] sm:$0xff]
    %v225 = vld [vmem:[#allocation5 + $0x440] sm:$0xff]
    %v226 = vld [vmem:[#allocation5 + $0x448] sm:$0xff]
    %v227 = vld [vmem:[#allocation5 + $0x450] sm:$0xff]
    %v228 = vld [vmem:[#allocation5 + $0x458] sm:$0xff]
    %v229 = vld [vmem:[#allocation5 + $0x460] sm:$0xff]
    %v230 = vld [vmem:[#allocation5 + $0x468] sm:$0xff]
    %v231 = vld [vmem:[#allocation5 + $0x470] sm:$0xff]
    %v232 = vld [vmem:[#allocation5 + $0x478] sm:$0xff]
    %v233 = vld [vmem:[#allocation5 + $0x480] sm:$0xff]
    %v234 = vld [vmem:[#allocation5 + $0x488] sm:$0xff]
    %v235 = vld [vmem:[#allocation5 + $0x490] sm:$0xff]
    %v236 = vld [vmem:[#allocation5 + $0x498] sm:$0xff]
    %v237 = vld [vmem:[#allocation5 + $0x4a0] sm:$0xff]
    %v238 = vld [vmem:[#allocation5 + $0x4a8] sm:$0xff]
    %v239 = vld [vmem:[#allocation5 + $0x4b0] sm:$0xff]
    %v240 = vld [vmem:[#allocation5 + $0x4b8] sm:$0xff]
    %v241 = vld [vmem:[#allocation5 + $0x4c0] sm:$0xff]
    %v242 = vld [vmem:[#allocation5 + $0x4c8] sm:$0xff]
    %v243 = vld [vmem:[#allocation5 + $0x4d0] sm:$0xff]
    %v244 = vld [vmem:[#allocation5 + $0x4d8] sm:$0xff]
    %v245 = vld [vmem:[#allocation5 + $0x4e0] sm:$0xff]
    %v246 = vld [vmem:[#allocation5 + $0x4e8] sm:$0xff]
    %v247 = vld [vmem:[#allocation5 + $0x4f0] sm:$0xff]
    %v248 = vld [vmem:[#allocation5 + $0x4f8] sm:$0xff]
    %v249 = vld [vmem:[#allocation5 + $0x500] sm:$0xff]
    %v250 = vld [vmem:[#allocation5 + $0x508] sm:$0xff]
    %v251 = vld [vmem:[#allocation5 + $0x510] sm:$0xff]
    %v252 = vld [vmem:[#allocation5 + $0x518] sm:$0xff]
    %v253 = vld [vmem:[#allocation5 + $0x520] sm:$0xff]
    %v254 = vld [vmem:[#allocation5 + $0x528] sm:$0xff]
    %v255 = vld [vmem:[#allocation5 + $0x530] sm:$0xff]
    %v256 = vld [vmem:[#allocation5 + $0x538] sm:$0xff]
    %v257 = vld [vmem:[#allocation5 + $0x540] sm:$0xff]
    %v258 = vld [vmem:[#allocation5 + $0x548] sm:$0xff]
    %v259 = vld [vmem:[#allocation5 + $0x550] sm:$0xff]
    %v260 = vld [vmem:[#allocation5 + $0x558] sm:$0xff]
    %v261 = vld [vmem:[#allocation5 + $0x560] sm:$0xff]
    %v262 = vld [vmem:[#allocation5 + $0x568] sm:$0xff]
    %v263 = vld [vmem:[#allocation5 + $0x570] sm:$0xff]
    %v264 = vld [vmem:[#allocation5 + $0x578] sm:$0xff]
    %v265 = vld [vmem:[#allocation5 + $0x580] sm:$0xff]
    %v266 = vld [vmem:[#allocation5 + $0x588] sm:$0xff]
    %v267 = vld [vmem:[#allocation5 + $0x590] sm:$0xff]
    %v268 = vld [vmem:[#allocation5 + $0x598] sm:$0xff]
    %v269 = vld [vmem:[#allocation5 + $0x5a0] sm:$0xff]
    %v270 = vld [vmem:[#allocation5 + $0x5a8] sm:$0xff]
    %v271 = vld [vmem:[#allocation5 + $0x5b0] sm:$0xff]
    %v272 = vld [vmem:[#allocation5 + $0x5b8] sm:$0xff]
    %v273 = vld [vmem:[#allocation5 + $0x5c0] sm:$0xff]
    %v274 = vld [vmem:[#allocation5 + $0x5c8] sm:$0xff]
    %v275 = vld [vmem:[#allocation5 + $0x5d0] sm:$0xff]
    %v276 = vld [vmem:[#allocation5 + $0x5d8] sm:$0xff]
    %v277 = vld [vmem:[#allocation5 + $0x5e0] sm:$0xff]
    %v278 = vld [vmem:[#allocation5 + $0x5e8] sm:$0xff]
    %v279 = vld [vmem:[#allocation5 + $0x5f0] sm:$0xff]
    %v280 = vld [vmem:[#allocation5 + $0x5f8] sm:$0xff]
    %v281 = vld [vmem:[#allocation5 + $0x600] sm:$0xff]
    %v282 = vld [vmem:[#allocation5 + $0x608] sm:$0xff]
    %v283 = vld [vmem:[#allocation5 + $0x610] sm:$0xff]
    %v284 = vld [vmem:[#allocation5 + $0x618] sm:$0xff]
    %v285 = vld [vmem:[#allocation5 + $0x620] sm:$0xff]
    %v286 = vld [vmem:[#allocation5 + $0x628] sm:$0xff]
    %v287 = vld [vmem:[#allocation5 + $0x630] sm:$0xff]
    %v288 = vld [vmem:[#allocation5 + $0x638] sm:$0xff]
    %v289 = vld [vmem:[#allocation5 + $0x640] sm:$0xff]
    %v290 = vld [vmem:[#allocation5 + $0x648] sm:$0xff]
    %v291 = vld [vmem:[#allocation5 + $0x650] sm:$0xff]
    %v292 = vld [vmem:[#allocation5 + $0x658] sm:$0xff]
    %v293 = vld [vmem:[#allocation5 + $0x660] sm:$0xff]
    %v294 = vld [vmem:[#allocation5 + $0x668] sm:$0xff]
    %v295 = vld [vmem:[#allocation5 + $0x670] sm:$0xff]
    %v296 = vld [vmem:[#allocation5 + $0x678] sm:$0xff]
    %v297 = vld [vmem:[#allocation5 + $0x680] sm:$0xff]
    %v298 = vld [vmem:[#allocation5 + $0x688] sm:$0xff]
    %v299 = vld [vmem:[#allocation5 + $0x690] sm:$0xff]
    %v300 = vld [vmem:[#allocation5 + $0x698] sm:$0xff]
    %v301 = vld [vmem:[#allocation5 + $0x6a0] sm:$0xff]
    %v302 = vld [vmem:[#allocation5 + $0x6a8] sm:$0xff]
    %v303 = vld [vmem:[#allocation5 + $0x6b0] sm:$0xff]
    %v304 = vld [vmem:[#allocation5 + $0x6b8] sm:$0xff]
    %v305 = vld [vmem:[#allocation5 + $0x6c0] sm:$0xff]
    %v306 = vld [vmem:[#allocation5 + $0x6c8] sm:$0xff]
    %v307 = vld [vmem:[#allocation5 + $0x6d0] sm:$0xff]
    %v308 = vld [vmem:[#allocation5 + $0x6d8] sm:$0xff]
    %v309 = vld [vmem:[#allocation5 + $0x6e0] sm:$0xff]
    %v310 = vld [vmem:[#allocation5 + $0x6e8] sm:$0xff]
    %v311 = vld [vmem:[#allocation5 + $0x6f0] sm:$0xff]
    %v312 = vld [vmem:[#allocation5 + $0x6f8] sm:$0xff]
    %v313 = vld [vmem:[#allocation5 + $0x700] sm:$0xff]
    %v314 = vld [vmem:[#allocation5 + $0x708] sm:$0xff]
    %v315 = vld [vmem:[#allocation5 + $0x710] sm:$0xff]
    %v316 = vld [vmem:[#allocation5 + $0x718] sm:$0xff]
    %v317 = vld [vmem:[#allocation5 + $0x720] sm:$0xff]
    %v318 = vld [vmem:[#allocation5 + $0x728] sm:$0xff]
    %v319 = vld [vmem:[#allocation5 + $0x730] sm:$0xff]
    %v320 = vld [vmem:[#allocation5 + $0x738] sm:$0xff]
    %v321 = vld [vmem:[#allocation5 + $0x740] sm:$0xff]
    %v322 = vld [vmem:[#allocation5 + $0x748] sm:$0xff]
    %v323 = vld [vmem:[#allocation5 + $0x750] sm:$0xff]
    %v324 = vld [vmem:[#allocation5 + $0x758] sm:$0xff]
    %v325 = vld [vmem:[#allocation5 + $0x760] sm:$0xff]
    %v326 = vld [vmem:[#allocation5 + $0x768] sm:$0xff]
    %v327 = vld [vmem:[#allocation5 + $0x770] sm:$0xff]
    %v328 = vld [vmem:[#allocation5 + $0x778] sm:$0xff]
    %v329 = vld [vmem:[#allocation5 + $0x780] sm:$0xff]
    %v330 = vld [vmem:[#allocation5 + $0x788] sm:$0xff]
    %v331 = vld [vmem:[#allocation5 + $0x790] sm:$0xff]
    %v332 = vld [vmem:[#allocation5 + $0x798] sm:$0xff]
    %v333 = vld [vmem:[#allocation5 + $0x7a0] sm:$0xff]
    %v334 = vld [vmem:[#allocation5 + $0x7a8] sm:$0xff]
    %v335 = vld [vmem:[#allocation5 + $0x7b0] sm:$0xff]
    %v336 = vld [vmem:[#allocation5 + $0x7b8] sm:$0xff]
    %v337 = vld [vmem:[#allocation5 + $0x7c0] sm:$0xff]
    %v338 = vld [vmem:[#allocation5 + $0x7c8] sm:$0xff]
    %v339 = vld [vmem:[#allocation5 + $0x7d0] sm:$0xff]
    %v340 = vld [vmem:[#allocation5 + $0x7d8] sm:$0xff]
    %v341 = vld [vmem:[#allocation5 + $0x7e0] sm:$0xff]
    %v342 = vld [vmem:[#allocation5 + $0x7e8] sm:$0xff]
    %v343 = vld [vmem:[#allocation5 + $0x7f0] sm:$0xff]
    %v344 = vld [vmem:[#allocation5 + $0x7f8] sm:$0xff]
    %v345 = vld [vmem:[#allocation5 + $0x800] sm:$0xff]
    %v346 = vld [vmem:[#allocation5 + $0x808] sm:$0xff]
    %v347 = vld [vmem:[#allocation5 + $0x810] sm:$0xff]
    %v348 = vld [vmem:[#allocation5 + $0x818] sm:$0xff]
    %v349 = vld [vmem:[#allocation5 + $0x820] sm:$0xff]
    %v350 = vld [vmem:[#allocation5 + $0x828] sm:$0xff]
    %v351 = vld [vmem:[#allocation5 + $0x830] sm:$0xff]
    %v352 = vld [vmem:[#allocation5 + $0x838] sm:$0xff]
    %v353 = vld [vmem:[#allocation5 + $0x840] sm:$0xff]
    %v354 = vld [vmem:[#allocation5 + $0x848] sm:$0xff]
    %v355 = vld [vmem:[#allocation5 + $0x850] sm:$0xff]
    %v356 = vld [vmem:[#allocation5 + $0x858] sm:$0xff]
    %v357 = vld [vmem:[#allocation5 + $0x860] sm:$0xff]
    %v358 = vld [vmem:[#allocation5 + $0x868] sm:$0xff]
    %v359 = vld [vmem:[#allocation5 + $0x870] sm:$0xff]
    %v360 = vld [vmem:[#allocation5 + $0x878] sm:$0xff]
    %v361 = vld [vmem:[#allocation5 + $0x880] sm:$0xff]
    %v362 = vld [vmem:[#allocation5 + $0x888] sm:$0xff]
    %v363 = vld [vmem:[#allocation5 + $0x890] sm:$0xff]
    %v364 = vld [vmem:[#allocation5 + $0x898] sm:$0xff]
    %v365 = vld [vmem:[#allocation5 + $0x8a0] sm:$0xff]
    %v366 = vld [vmem:[#allocation5 + $0x8a8] sm:$0xff]
    %v367 = vld [vmem:[#allocation5 + $0x8b0] sm:$0xff]
    %v368 = vld [vmem:[#allocation5 + $0x8b8] sm:$0xff]
    %v369 = vld [vmem:[#allocation5 + $0x8c0] sm:$0xff]
    %v370 = vld [vmem:[#allocation5 + $0x8c8] sm:$0xff]
    %v371 = vld [vmem:[#allocation5 + $0x8d0] sm:$0xff]
    %v372 = vld [vmem:[#allocation5 + $0x8d8] sm:$0xff]
    %v373 = vld [vmem:[#allocation5 + $0x8e0] sm:$0xff]
    %v374 = vld [vmem:[#allocation5 + $0x8e8] sm:$0xff]
    %v375 = vld [vmem:[#allocation5 + $0x8f0] sm:$0xff]
    %v376 = vld [vmem:[#allocation5 + $0x8f8] sm:$0xff]
    %v377 = vld [vmem:[#allocation5 + $0x900] sm:$0xff]
    %v378 = vld [vmem:[#allocation5 + $0x908] sm:$0xff]
    %v379 = vld [vmem:[#allocation5 + $0x910] sm:$0xff]
    %v380 = vld [vmem:[#allocation5 + $0x918] sm:$0xff]
    %v381 = vld [vmem:[#allocation5 + $0x920] sm:$0xff]
    %v382 = vld [vmem:[#allocation5 + $0x928] sm:$0xff]
    %v383 = vld [vmem:[#allocation5 + $0x930] sm:$0xff]
    %v384 = vld [vmem:[#allocation5 + $0x938] sm:$0xff]
    %v385 = vld [vmem:[#allocation5 + $0x940] sm:$0xff]
    %v386 = vld [vmem:[#allocation5 + $0x948] sm:$0xff]
    %v387 = vld [vmem:[#allocation5 + $0x950] sm:$0xff]
    %v388 = vld [vmem:[#allocation5 + $0x958] sm:$0xff]
    %v389 = vld [vmem:[#allocation5 + $0x960] sm:$0xff]
    %v390 = vld [vmem:[#allocation5 + $0x968] sm:$0xff]
    %v391 = vld [vmem:[#allocation5 + $0x970] sm:$0xff]
    %v392 = vld [vmem:[#allocation5 + $0x978] sm:$0xff]
    %v393 = vld [vmem:[#allocation5 + $0x980] sm:$0xff]
    %v394 = vld [vmem:[#allocation5 + $0x988] sm:$0xff]
    %v395 = vld [vmem:[#allocation5 + $0x990] sm:$0xff]
    %v396 = vld [vmem:[#allocation5 + $0x998] sm:$0xff]
    %v397 = vld [vmem:[#allocation5 + $0x9a0] sm:$0xff]
    %v398 = vld [vmem:[#allocation5 + $0x9a8] sm:$0xff]
    %v399 = vld [vmem:[#allocation5 + $0x9b0] sm:$0xff]
    %v400 = vld [vmem:[#allocation5 + $0x9b8] sm:$0xff]
    %v401 = vld [vmem:[#allocation5 + $0x9c0] sm:$0xff]
    %v402 = vld [vmem:[#allocation5 + $0x9c8] sm:$0xff]
    %v403 = vld [vmem:[#allocation5 + $0x9d0] sm:$0xff]
    %v404 = vld [vmem:[#allocation5 + $0x9d8] sm:$0xff]
    %v405 = vld [vmem:[#allocation5 + $0x9e0] sm:$0xff]
    %v406 = vld [vmem:[#allocation5 + $0x9e8] sm:$0xff]
    %v407 = vld [vmem:[#allocation5 + $0x9f0] sm:$0xff]
    %v408 = vld [vmem:[#allocation5 + $0x9f8] sm:$0xff]
    %v409 = vld [vmem:[#allocation5 + $0xa00] sm:$0xff]
    %v410 = vld [vmem:[#allocation5 + $0xa08] sm:$0xff]
    %v411 = vld [vmem:[#allocation5 + $0xa10] sm:$0xff]
    %v412 = vld [vmem:[#allocation5 + $0xa18] sm:$0xff]
    %v413 = vld [vmem:[#allocation5 + $0xa20] sm:$0xff]
    %v414 = vld [vmem:[#allocation5 + $0xa28] sm:$0xff]
    %v415 = vld [vmem:[#allocation5 + $0xa30] sm:$0xff]
    %v416 = vld [vmem:[#allocation5 + $0xa38] sm:$0xff]
    %v417 = vld [vmem:[#allocation5 + $0xa40] sm:$0xff]
    %v418 = vld [vmem:[#allocation5 + $0xa48] sm:$0xff]
    %v419 = vld [vmem:[#allocation5 + $0xa50] sm:$0xff]
    %v420 = vld [vmem:[#allocation5 + $0xa58] sm:$0xff]
    %v421 = vld [vmem:[#allocation5 + $0xa60] sm:$0xff]
    %v422 = vld [vmem:[#allocation5 + $0xa68] sm:$0xff]
    %v423 = vld [vmem:[#allocation5 + $0xa70] sm:$0xff]
    %v424 = vld [vmem:[#allocation5 + $0xa78] sm:$0xff]
    %v425 = vld [vmem:[#allocation5 + $0xa80] sm:$0xff]
    %v426 = vld [vmem:[#allocation5 + $0xa88] sm:$0xff]
    %v427 = vld [vmem:[#allocation5 + $0xa90] sm:$0xff]
    %v428 = vld [vmem:[#allocation5 + $0xa98] sm:$0xff]
    %v429 = vld [vmem:[#allocation5 + $0xaa0] sm:$0xff]
    %v430 = vld [vmem:[#allocation5 + $0xaa8] sm:$0xff]
    %v431 = vld [vmem:[#allocation5 + $0xab0] sm:$0xff]
    %v432 = vld [vmem:[#allocation5 + $0xab8] sm:$0xff]
    %v433 = vld [vmem:[#allocation5 + $0xac0] sm:$0xff]
    %v434 = vld [vmem:[#allocation5 + $0xac8] sm:$0xff]
    %v435 = vld [vmem:[#allocation5 + $0xad0] sm:$0xff]
    %v436 = vld [vmem:[#allocation5 + $0xad8] sm:$0xff]
    %v437 = vld [vmem:[#allocation5 + $0xae0] sm:$0xff]
    %v438 = vld [vmem:[#allocation5 + $0xae8] sm:$0xff]
    %v439 = vld [vmem:[#allocation5 + $0xaf0] sm:$0xff]
    %v440 = vld [vmem:[#allocation5 + $0xaf8] sm:$0xff]
    %v441 = vld [vmem:[#allocation5 + $0xb00] sm:$0xff]
    %v442 = vld [vmem:[#allocation5 + $0xb08] sm:$0xff]
    %v443 = vld [vmem:[#allocation5 + $0xb10] sm:$0xff]
    %v444 = vld [vmem:[#allocation5 + $0xb18] sm:$0xff]
    %v445 = vld [vmem:[#allocation5 + $0xb20] sm:$0xff]
    %v446 = vld [vmem:[#allocation5 + $0xb28] sm:$0xff]
    %v447 = vld [vmem:[#allocation5 + $0xb30] sm:$0xff]
    %v448 = vld [vmem:[#allocation5 + $0xb38] sm:$0xff]
    %v449 = vld [vmem:[#allocation5 + $0xb40] sm:$0xff]
    %v450 = vld [vmem:[#allocation5 + $0xb48] sm:$0xff]
    %v451 = vld [vmem:[#allocation5 + $0xb50] sm:$0xff]
    %v452 = vld [vmem:[#allocation5 + $0xb58] sm:$0xff]
    %v453 = vld [vmem:[#allocation5 + $0xb60] sm:$0xff]
    %v454 = vld [vmem:[#allocation5 + $0xb68] sm:$0xff]
    %v455 = vld [vmem:[#allocation5 + $0xb70] sm:$0xff]
    %v456 = vld [vmem:[#allocation5 + $0xb78] sm:$0xff]
    %v457 = vld [vmem:[#allocation5 + $0xb80] sm:$0xff]
    %v458 = vld [vmem:[#allocation5 + $0xb88] sm:$0xff]
    %v459 = vld [vmem:[#allocation5 + $0xb90] sm:$0xff]
    %v460 = vld [vmem:[#allocation5 + $0xb98] sm:$0xff]
    %v461 = vld [vmem:[#allocation5 + $0xba0] sm:$0xff]
    %v462 = vld [vmem:[#allocation5 + $0xba8] sm:$0xff]
    %v463 = vld [vmem:[#allocation5 + $0xbb0] sm:$0xff]
    %v464 = vld [vmem:[#allocation5 + $0xbb8] sm:$0xff]
    %v465 = vld [vmem:[#allocation5 + $0xbc0] sm:$0xff]
    %v466 = vld [vmem:[#allocation5 + $0xbc8] sm:$0xff]
    %v467 = vld [vmem:[#allocation5 + $0xbd0] sm:$0xff]
    %v468 = vld [vmem:[#allocation5 + $0xbd8] sm:$0xff]
    %v469 = vld [vmem:[#allocation5 + $0xbe0] sm:$0xff]
    %v470 = vld [vmem:[#allocation5 + $0xbe8] sm:$0xff]
    %v471 = vld [vmem:[#allocation5 + $0xbf0] sm:$0xff]
    %v472 = vld [vmem:[#allocation5 + $0xbf8] sm:$0xff]
    %v473 = vld [vmem:[#allocation7] sm:$0xf]
    %v475 = vlaneseq
    %v476 = vshrl.u32 %v475, 7
    %v477 = vsub.s32 0, %v476
    %v478 = vrot.slane %v473, %v477
    %v479 = vlaneseq
    %v480 = vshrl.u32 %v479, 7
    %v481 = vsub.s32 1, %v480
    %v482 = vrot.slane %v473, %v481
    %v483 = vlaneseq
    %v484 = vshrl.u32 %v483, 7
    %v485 = vsub.s32 2, %v484
    %v486 = vrot.slane %v473, %v485
    %v487 = vlaneseq
    %v488 = vshrl.u32 %v487, 7
    %v489 = vsub.s32 3, %v488
    %v490 = vrot.slane %v473, %v489
    %495 = vmatprep.subr.mxu0 %v150
    %496 = vmatpush1.msra.mxu0 %v149
    %497 = vmatprep.subr.mxu0 %v146
    %498 = vmatpush1.msra.mxu0 %v145
    %499 = vmatprep.subr.mxu0 %v142
    %500 = vmatpush1.msra.mxu0 %v141
    %501 = vmatprep.subr.mxu0 %v138
    %502 = vmatpush1.msra.mxu0 %v137
    %503 = vmatprep.subr.mxu0 %v134
    %504 = vmatpush1.msra.mxu0 %v133
    %505 = vmatprep.subr.mxu0 %v130
    %506 = vmatpush1.msra.mxu0 %v129
    %507 = vmatprep.subr.mxu0 %v126
    %508 = vmatpush1.msra.mxu0 %v125
    %509 = vmatprep.subr.mxu0 %v122
    %510 = vmatpush1.msra.mxu0 %v121
    %511 = vmatprep.subr.mxu0 %v118
    %512 = vmatpush1.msra.mxu0 %v117
    %513 = vmatprep.subr.mxu0 %v114
    %514 = vmatpush1.msra.mxu0 %v113
    %515 = vmatprep.subr.mxu0 %v110
    %516 = vmatpush1.msra.mxu0 %v109
    %517 = vmatprep.subr.mxu0 %v106
    %518 = vmatpush1.msra.mxu0 %v105
    %519 = vmatprep.subr.mxu0 %v102
    %520 = vmatpush1.msra.mxu0 %v101
    %521 = vmatprep.subr.mxu0 %v98
    %522 = vmatpush1.msra.mxu0 %v97
    %523 = vmatprep.subr.mxu0 %v94
    %524 = vmatpush1.msra.mxu0 %v93
    %525 = vmatprep.subr.mxu0 %v90
    %526 = vmatpush1.msra.mxu0 %v89
    %527 = vmatprep.subr.mxu0 %v214
    %528 = vmatpush2.msra.mxu0 %v213
    %529 = vmatprep.subr.mxu0 %v210
    %530 = vmatpush2.msra.mxu0 %v209
    %531 = vmatprep.subr.mxu0 %v206
    %532 = vmatpush2.msra.mxu0 %v205
    %533 = vmatprep.subr.mxu0 %v202
    %534 = vmatpush2.msra.mxu0 %v201
    %535 = vmatprep.subr.mxu0 %v198
    %536 = vmatpush2.msra.mxu0 %v197
    %537 = vmatprep.subr.mxu0 %v194
    %538 = vmatpush2.msra.mxu0 %v193
    %539 = vmatprep.subr.mxu0 %v190
    %540 = vmatpush2.msra.mxu0 %v189
    %541 = vmatprep.subr.mxu0 %v186
    %542 = vmatpush2.msra.mxu0 %v185
    %543 = vmatprep.subr.mxu0 %v182
    %544 = vmatpush2.msra.mxu0 %v181
    %545 = vmatprep.subr.mxu0 %v178
    %546 = vmatpush2.msra.mxu0 %v177
    %547 = vmatprep.subr.mxu0 %v174
    %548 = vmatpush2.msra.mxu0 %v173
    %549 = vmatprep.subr.mxu0 %v170
    %550 = vmatpush2.msra.mxu0 %v169
    %551 = vmatprep.subr.mxu0 %v166
    %552 = vmatpush2.msra.mxu0 %v165
    %553 = vmatprep.subr.mxu0 %v162
    %554 = vmatpush2.msra.mxu0 %v161
    %555 = vmatprep.subr.mxu0 %v158
    %556 = vmatpush2.msra.mxu0 %v157
    %557 = vmatprep.subr.mxu0 %v154
    %558 = vmatpush2.msra.mxu0 %v153
    %559 = vmatprep.mubr.f32.mxu0 %v84
    %560 = vmatmul.mubr.f32.gmra.mxu0 %v83
    %v561 = vpop.f32.mrf.mxu0
    %v562 = vadd.f32 %v478, %v561
    %v563 = vpop.f32.mrf.mxu0
    %v564 = vadd.f32 %v482, %v563
    %565 = vdwg.mxu0
    %566 = vmatprep.subr.mxu0 %v278
    %567 = vmatpush1.msra.mxu0 %v277
    %568 = vmatprep.subr.mxu0 %v274
    %569 = vmatpush1.msra.mxu0 %v273
    %570 = vmatprep.subr.mxu0 %v270
    %571 = vmatpush1.msra.mxu0 %v269
    %572 = vmatprep.subr.mxu0 %v266
    %573 = vmatpush1.msra.mxu0 %v265
    %574 = vmatprep.subr.mxu0 %v262
    %575 = vmatpush1.msra.mxu0 %v261
    %576 = vmatprep.subr.mxu0 %v258
    %577 = vmatpush1.msra.mxu0 %v257
    %578 = vmatprep.subr.mxu0 %v254
    %579 = vmatpush1.msra.mxu0 %v253
    %580 = vmatprep.subr.mxu0 %v250
    %581 = vmatpush1.msra.mxu0 %v249
    %582 = vmatprep.subr.mxu0 %v246
    %583 = vmatpush1.msra.mxu0 %v245
    %584 = vmatprep.subr.mxu0 %v242
    %585 = vmatpush1.msra.mxu0 %v241
    %586 = vmatprep.subr.mxu0 %v238
    %587 = vmatpush1.msra.mxu0 %v237
    %588 = vmatprep.subr.mxu0 %v234
    %589 = vmatpush1.msra.mxu0 %v233
    %590 = vmatprep.subr.mxu0 %v230
    %591 = vmatpush1.msra.mxu0 %v229
    %592 = vmatprep.subr.mxu0 %v226
    %593 = vmatpush1.msra.mxu0 %v225
    %594 = vmatprep.subr.mxu0 %v222
    %595 = vmatpush1.msra.mxu0 %v221
    %596 = vmatprep.subr.mxu0 %v218
    %597 = vmatpush1.msra.mxu0 %v217
    %598 = vmatprep.subr.mxu0 %v342
    %599 = vmatpush2.msra.mxu0 %v341
    %600 = vmatprep.subr.mxu0 %v338
    %601 = vmatpush2.msra.mxu0 %v337
    %602 = vmatprep.subr.mxu0 %v334
    %603 = vmatpush2.msra.mxu0 %v333
    %604 = vmatprep.subr.mxu0 %v330
    %605 = vmatpush2.msra.mxu0 %v329
    %606 = vmatprep.subr.mxu0 %v326
    %607 = vmatpush2.msra.mxu0 %v325
    %608 = vmatprep.subr.mxu0 %v322
    %609 = vmatpush2.msra.mxu0 %v321
    %610 = vmatprep.subr.mxu0 %v318
    %611 = vmatpush2.msra.mxu0 %v317
    %612 = vmatprep.subr.mxu0 %v314
    %613 = vmatpush2.msra.mxu0 %v313
    %614 = vmatprep.subr.mxu0 %v310
    %615 = vmatpush2.msra.mxu0 %v309
    %616 = vmatprep.subr.mxu0 %v306
    %617 = vmatpush2.msra.mxu0 %v305
    %618 = vmatprep.subr.mxu0 %v302
    %619 = vmatpush2.msra.mxu0 %v301
    %620 = vmatprep.subr.mxu0 %v298
    %621 = vmatpush2.msra.mxu0 %v297
    %622 = vmatprep.subr.mxu0 %v294
    %623 = vmatpush2.msra.mxu0 %v293
    %624 = vmatprep.subr.mxu0 %v290
    %625 = vmatpush2.msra.mxu0 %v289
    %626 = vmatprep.subr.mxu0 %v286
    %627 = vmatpush2.msra.mxu0 %v285
    %628 = vmatprep.subr.mxu0 %v282
    %629 = vmatpush2.msra.mxu0 %v281
    %630 = vmatprep.mubr.f32.mxu0 %v86
    %631 = vmatmul.mubr.f32.gmra.mxu0 %v85
    %v632 = vpop.f32.mrf.mxu0
    %v633 = vadd.f32 %v562, %v632
    %v634 = vpop.f32.mrf.mxu0
    %v635 = vadd.f32 %v564, %v634
    %636 = vdwg.mxu0
    %637 = vmatprep.subr.mxu0 %v406
    %638 = vmatpush1.msra.mxu0 %v405
    %639 = vmatprep.subr.mxu0 %v402
    %640 = vmatpush1.msra.mxu0 %v401
    %641 = vmatprep.subr.mxu0 %v398
    %642 = vmatpush1.msra.mxu0 %v397
    %643 = vmatprep.subr.mxu0 %v394
    %644 = vmatpush1.msra.mxu0 %v393
    %645 = vmatprep.subr.mxu0 %v390
    %646 = vmatpush1.msra.mxu0 %v389
    %647 = vmatprep.subr.mxu0 %v386
    %648 = vmatpush1.msra.mxu0 %v385
    %649 = vmatprep.subr.mxu0 %v382
    %650 = vmatpush1.msra.mxu0 %v381
    %651 = vmatprep.subr.mxu0 %v378
    %652 = vmatpush1.msra.mxu0 %v377
    %653 = vmatprep.subr.mxu0 %v374
    %654 = vmatpush1.msra.mxu0 %v373
    %655 = vmatprep.subr.mxu0 %v370
    %656 = vmatpush1.msra.mxu0 %v369
    %657 = vmatprep.subr.mxu0 %v366
    %658 = vmatpush1.msra.mxu0 %v365
    %659 = vmatprep.subr.mxu0 %v362
    %660 = vmatpush1.msra.mxu0 %v361
    %661 = vmatprep.subr.mxu0 %v358
    %662 = vmatpush1.msra.mxu0 %v357
    %663 = vmatprep.subr.mxu0 %v354
    %664 = vmatpush1.msra.mxu0 %v353
    %665 = vmatprep.subr.mxu0 %v350
    %666 = vmatpush1.msra.mxu0 %v349
    %667 = vmatprep.subr.mxu0 %v346
    %668 = vmatpush1.msra.mxu0 %v345
    %669 = vmatprep.subr.mxu0 %v470
    %670 = vmatpush2.msra.mxu0 %v469
    %671 = vmatprep.subr.mxu0 %v466
    %672 = vmatpush2.msra.mxu0 %v465
    %673 = vmatprep.subr.mxu0 %v462
    %674 = vmatpush2.msra.mxu0 %v461
    %675 = vmatprep.subr.mxu0 %v458
    %676 = vmatpush2.msra.mxu0 %v457
    %677 = vmatprep.subr.mxu0 %v454
    %678 = vmatpush2.msra.mxu0 %v453
    %679 = vmatprep.subr.mxu0 %v450
    %680 = vmatpush2.msra.mxu0 %v449
    %681 = vmatprep.subr.mxu0 %v446
    %682 = vmatpush2.msra.mxu0 %v445
    %683 = vmatprep.subr.mxu0 %v442
    %684 = vmatpush2.msra.mxu0 %v441
    %685 = vmatprep.subr.mxu0 %v438
    %686 = vmatpush2.msra.mxu0 %v437
    %687 = vmatprep.subr.mxu0 %v434
    %688 = vmatpush2.msra.mxu0 %v433
    %689 = vmatprep.subr.mxu0 %v430
    %690 = vmatpush2.msra.mxu0 %v429
    %691 = vmatprep.subr.mxu0 %v426
    %692 = vmatpush2.msra.mxu0 %v425
    %693 = vmatprep.subr.mxu0 %v422
    %694 = vmatpush2.msra.mxu0 %v421
    %695 = vmatprep.subr.mxu0 %v418
    %696 = vmatpush2.msra.mxu0 %v417
    %697 = vmatprep.subr.mxu0 %v414
    %698 = vmatpush2.msra.mxu0 %v413
    %699 = vmatprep.subr.mxu0 %v410
    %700 = vmatpush2.msra.mxu0 %v409
    %701 = vmatprep.mubr.f32.mxu0 %v88
    %702 = vmatmul.mubr.f32.gmra.mxu0 %v87
    %v703 = vpop.f32.mrf.mxu0
    %v704 = vadd.f32 %v633, %v703
    %v705 = vpop.f32.mrf.mxu0
    %v706 = vadd.f32 %v635, %v705
    %707 = vdwg.mxu0
    %708 = vmatprep.subr.mxu0 %v152
    %709 = vmatpush1.msra.mxu0 %v151
    %710 = vmatprep.subr.mxu0 %v148
    %711 = vmatpush1.msra.mxu0 %v147
    %712 = vmatprep.subr.mxu0 %v144
    %713 = vmatpush1.msra.mxu0 %v143
    %714 = vmatprep.subr.mxu0 %v140
    %715 = vmatpush1.msra.mxu0 %v139
    %716 = vmatprep.subr.mxu0 %v136
    %717 = vmatpush1.msra.mxu0 %v135
    %718 = vmatprep.subr.mxu0 %v132
    %719 = vmatpush1.msra.mxu0 %v131
    %720 = vmatprep.subr.mxu0 %v128
    %721 = vmatpush1.msra.mxu0 %v127
    %722 = vmatprep.subr.mxu0 %v124
    %723 = vmatpush1.msra.mxu0 %v123
    %724 = vmatprep.subr.mxu0 %v120
    %725 = vmatpush1.msra.mxu0 %v119
    %726 = vmatprep.subr.mxu0 %v116
    %727 = vmatpush1.msra.mxu0 %v115
    %728 = vmatprep.subr.mxu0 %v112
    %729 = vmatpush1.msra.mxu0 %v111
    %730 = vmatprep.subr.mxu0 %v108
    %731 = vmatpush1.msra.mxu0 %v107
    %732 = vmatprep.subr.mxu0 %v104
    %733 = vmatpush1.msra.mxu0 %v103
    %734 = vmatprep.subr.mxu0 %v100
    %735 = vmatpush1.msra.mxu0 %v99
    %736 = vmatprep.subr.mxu0 %v96
    %737 = vmatpush1.msra.mxu0 %v95
    %738 = vmatprep.subr.mxu0 %v92
    %739 = vmatpush1.msra.mxu0 %v91
    %740 = vmatprep.subr.mxu0 %v216
    %741 = vmatpush2.msra.mxu0 %v215
    %742 = vmatprep.subr.mxu0 %v212
    %743 = vmatpush2.msra.mxu0 %v211
    %744 = vmatprep.subr.mxu0 %v208
    %745 = vmatpush2.msra.mxu0 %v207
    %746 = vmatprep.subr.mxu0 %v204
    %747 = vmatpush2.msra.mxu0 %v203
    %748 = vmatprep.subr.mxu0 %v200
    %749 = vmatpush2.msra.mxu0 %v199
    %750 = vmatprep.subr.mxu0 %v196
    %751 = vmatpush2.msra.mxu0 %v195
    %752 = vmatprep.subr.mxu0 %v192
    %753 = vmatpush2.msra.mxu0 %v191
    %754 = vmatprep.subr.mxu0 %v188
    %755 = vmatpush2.msra.mxu0 %v187
    %756 = vmatprep.subr.mxu0 %v184
    %757 = vmatpush2.msra.mxu0 %v183
    %758 = vmatprep.subr.mxu0 %v180
    %759 = vmatpush2.msra.mxu0 %v179
    %760 = vmatprep.subr.mxu0 %v176
    %761 = vmatpush2.msra.mxu0 %v175
    %762 = vmatprep.subr.mxu0 %v172
    %763 = vmatpush2.msra.mxu0 %v171
    %764 = vmatprep.subr.mxu0 %v168
    %765 = vmatpush2.msra.mxu0 %v167
    %766 = vmatprep.subr.mxu0 %v164
    %767 = vmatpush2.msra.mxu0 %v163
    %768 = vmatprep.subr.mxu0 %v160
    %769 = vmatpush2.msra.mxu0 %v159
    %770 = vmatprep.subr.mxu0 %v156
    %771 = vmatpush2.msra.mxu0 %v155
    %772 = vmatprep.mubr.f32.mxu0 %v84
    %773 = vmatmul.mubr.f32.gmra.mxu0 %v83
    %v774 = vpop.f32.mrf.mxu0
    %v775 = vadd.f32 %v486, %v774
    %v776 = vpop.f32.mrf.mxu0
    %v777 = vadd.f32 %v490, %v776
    %778 = vdwg.mxu0
    %779 = vmatprep.subr.mxu0 %v280
    %780 = vmatpush1.msra.mxu0 %v279
    %781 = vmatprep.subr.mxu0 %v276
    %782 = vmatpush1.msra.mxu0 %v275
    %783 = vmatprep.subr.mxu0 %v272
    %784 = vmatpush1.msra.mxu0 %v271
    %785 = vmatprep.subr.mxu0 %v268
    %786 = vmatpush1.msra.mxu0 %v267
    %787 = vmatprep.subr.mxu0 %v264
    %788 = vmatpush1.msra.mxu0 %v263
    %789 = vmatprep.subr.mxu0 %v260
    %790 = vmatpush1.msra.mxu0 %v259
    %791 = vmatprep.subr.mxu0 %v256
    %792 = vmatpush1.msra.mxu0 %v255
    %793 = vmatprep.subr.mxu0 %v252
    %794 = vmatpush1.msra.mxu0 %v251
    %795 = vmatprep.subr.mxu0 %v248
    %796 = vmatpush1.msra.mxu0 %v247
    %797 = vmatprep.subr.mxu0 %v244
    %798 = vmatpush1.msra.mxu0 %v243
    %799 = vmatprep.subr.mxu0 %v240
    %800 = vmatpush1.msra.mxu0 %v239
    %801 = vmatprep.subr.mxu0 %v236
    %802 = vmatpush1.msra.mxu0 %v235
    %803 = vmatprep.subr.mxu0 %v232
    %804 = vmatpush1.msra.mxu0 %v231
    %805 = vmatprep.subr.mxu0 %v228
    %806 = vmatpush1.msra.mxu0 %v227
    %807 = vmatprep.subr.mxu0 %v224
    %808 = vmatpush1.msra.mxu0 %v223
    %809 = vmatprep.subr.mxu0 %v220
    %810 = vmatpush1.msra.mxu0 %v219
    %811 = vmatprep.subr.mxu0 %v344
    %812 = vmatpush2.msra.mxu0 %v343
    %813 = vmatprep.subr.mxu0 %v340
    %814 = vmatpush2.msra.mxu0 %v339
    %815 = vmatprep.subr.mxu0 %v336
    %816 = vmatpush2.msra.mxu0 %v335
    %817 = vmatprep.subr.mxu0 %v332
    %818 = vmatpush2.msra.mxu0 %v331
    %819 = vmatprep.subr.mxu0 %v328
    %820 = vmatpush2.msra.mxu0 %v327
    %821 = vmatprep.subr.mxu0 %v324
    %822 = vmatpush2.msra.mxu0 %v323
    %823 = vmatprep.subr.mxu0 %v320
    %824 = vmatpush2.msra.mxu0 %v319
    %825 = vmatprep.subr.mxu0 %v316
    %826 = vmatpush2.msra.mxu0 %v315
    %827 = vmatprep.subr.mxu0 %v312
    %828 = vmatpush2.msra.mxu0 %v311
    %829 = vmatprep.subr.mxu0 %v308
    %830 = vmatpush2.msra.mxu0 %v307
    %831 = vmatprep.subr.mxu0 %v304
    %832 = vmatpush2.msra.mxu0 %v303
    %833 = vmatprep.subr.mxu0 %v300
    %834 = vmatpush2.msra.mxu0 %v299
    %835 = vmatprep.subr.mxu0 %v296
    %836 = vmatpush2.msra.mxu0 %v295
    %837 = vmatprep.subr.mxu0 %v292
    %838 = vmatpush2.msra.mxu0 %v291
    %839 = vmatprep.subr.mxu0 %v288
    %840 = vmatpush2.msra.mxu0 %v287
    %841 = vmatprep.subr.mxu0 %v284
    %842 = vmatpush2.msra.mxu0 %v283
    %843 = vmatprep.mubr.f32.mxu0 %v86
    %844 = vmatmul.mubr.f32.gmra.mxu0 %v85
    %v845 = vpop.f32.mrf.mxu0
    %v846 = vadd.f32 %v775, %v845
    %v847 = vpop.f32.mrf.mxu0
    %v848 = vadd.f32 %v777, %v847
    %849 = vdwg.mxu0
    %850 = vmatprep.subr.mxu0 %v408
    %851 = vmatpush1.msra.mxu0 %v407
    %852 = vmatprep.subr.mxu0 %v404
    %853 = vmatpush1.msra.mxu0 %v403
    %854 = vmatprep.subr.mxu0 %v400
    %855 = vmatpush1.msra.mxu0 %v399
    %856 = vmatprep.subr.mxu0 %v396
    %857 = vmatpush1.msra.mxu0 %v395
    %858 = vmatprep.subr.mxu0 %v392
    %859 = vmatpush1.msra.mxu0 %v391
    %860 = vmatprep.subr.mxu0 %v388
    %861 = vmatpush1.msra.mxu0 %v387
    %862 = vmatprep.subr.mxu0 %v384
    %863 = vmatpush1.msra.mxu0 %v383
    %864 = vmatprep.subr.mxu0 %v380
    %865 = vmatpush1.msra.mxu0 %v379
    %866 = vmatprep.subr.mxu0 %v376
    %867 = vmatpush1.msra.mxu0 %v375
    %868 = vmatprep.subr.mxu0 %v372
    %869 = vmatpush1.msra.mxu0 %v371
    %870 = vmatprep.subr.mxu0 %v368
    %871 = vmatpush1.msra.mxu0 %v367
    %872 = vmatprep.subr.mxu0 %v364
    %873 = vmatpush1.msra.mxu0 %v363
    %874 = vmatprep.subr.mxu0 %v360
    %875 = vmatpush1.msra.mxu0 %v359
    %876 = vmatprep.subr.mxu0 %v356
    %877 = vmatpush1.msra.mxu0 %v355
    %878 = vmatprep.subr.mxu0 %v352
    %879 = vmatpush1.msra.mxu0 %v351
    %880 = vmatprep.subr.mxu0 %v348
    %881 = vmatpush1.msra.mxu0 %v347
    %882 = vmatprep.subr.mxu0 %v472
    %883 = vmatpush2.msra.mxu0 %v471
    %884 = vmatprep.subr.mxu0 %v468
    %885 = vmatpush2.msra.mxu0 %v467
    %886 = vmatprep.subr.mxu0 %v464
    %887 = vmatpush2.msra.mxu0 %v463
    %888 = vmatprep.subr.mxu0 %v460
    %889 = vmatpush2.msra.mxu0 %v459
    %890 = vmatprep.subr.mxu0 %v456
    %891 = vmatpush2.msra.mxu0 %v455
    %892 = vmatprep.subr.mxu0 %v452
    %893 = vmatpush2.msra.mxu0 %v451
    %894 = vmatprep.subr.mxu0 %v448
    %895 = vmatpush2.msra.mxu0 %v447
    %896 = vmatprep.subr.mxu0 %v444
    %897 = vmatpush2.msra.mxu0 %v443
    %898 = vmatprep.subr.mxu0 %v440
    %899 = vmatpush2.msra.mxu0 %v439
    %900 = vmatprep.subr.mxu0 %v436
    %901 = vmatpush2.msra.mxu0 %v435
    %902 = vmatprep.subr.mxu0 %v432
    %903 = vmatpush2.msra.mxu0 %v431
    %904 = vmatprep.subr.mxu0 %v428
    %905 = vmatpush2.msra.mxu0 %v427
    %906 = vmatprep.subr.mxu0 %v424
    %907 = vmatpush2.msra.mxu0 %v423
    %908 = vmatprep.subr.mxu0 %v420
    %909 = vmatpush2.msra.mxu0 %v419
    %910 = vmatprep.subr.mxu0 %v416
    %911 = vmatpush2.msra.mxu0 %v415
    %912 = vmatprep.subr.mxu0 %v412
    %913 = vmatpush2.msra.mxu0 %v411
    %914 = vmatprep.mubr.f32.mxu0 %v88
    %915 = vmatmul.mubr.f32.gmra.mxu0 %v87
    %v916 = vpop.f32.mrf.mxu0
    %v917 = vadd.f32 %v846, %v916
    %v918 = vpop.f32.mrf.mxu0
    %v919 = vadd.f32 %v848, %v918
    %920 = vdwg.mxu0
    %v921 = vmax.f32 %v704, 0.0
    %v922 = vmax.f32 %v706, 0.0
    %v923 = vmax.f32 %v917, 0.0
    %v924 = vmax.f32 %v919, 0.0
    %v925 = vld [vmem:[#allocation8] sm:$0xff]
    %v926 = vld [vmem:[#allocation8 + $0x8] sm:$0xff]
    %v927 = vld [vmem:[#allocation8 + $0x10] sm:$0xff]
    %v928 = vld [vmem:[#allocation8 + $0x18] sm:$0xff]
    %v929 = vld [vmem:[#allocation8 + $0x20] sm:$0xff]
    %v930 = vld [vmem:[#allocation8 + $0x28] sm:$0xff]
    %v931 = vld [vmem:[#allocation8 + $0x30] sm:$0xff]
    %v932 = vld [vmem:[#allocation8 + $0x38] sm:$0xff]
    %v933 = vld [vmem:[#allocation8 + $0x40] sm:$0xff]
    %v934 = vld [vmem:[#allocation8 + $0x48] sm:$0xff]
    %v935 = vld [vmem:[#allocation8 + $0x50] sm:$0xff]
    %v936 = vld [vmem:[#allocation8 + $0x58] sm:$0xff]
    %v937 = vld [vmem:[#allocation8 + $0x60] sm:$0xff]
    %v938 = vld [vmem:[#allocation8 + $0x68] sm:$0xff]
    %v939 = vld [vmem:[#allocation8 + $0x70] sm:$0xff]
    %v940 = vld [vmem:[#allocation8 + $0x78] sm:$0xff]
    %v941 = vld [vmem:[#allocation8 + $0x80] sm:$0xff]
    %v942 = vld [vmem:[#allocation8 + $0x88] sm:$0xff]
    %v943 = vld [vmem:[#allocation8 + $0x90] sm:$0xff]
    %v944 = vld [vmem:[#allocation8 + $0x98] sm:$0xff]
    %v945 = vld [vmem:[#allocation8 + $0xa0] sm:$0xff]
    %v946 = vld [vmem:[#allocation8 + $0xa8] sm:$0xff]
    %v947 = vld [vmem:[#allocation8 + $0xb0] sm:$0xff]
    %v948 = vld [vmem:[#allocation8 + $0xb8] sm:$0xff]
    %v949 = vld [vmem:[#allocation8 + $0xc0] sm:$0xff]
    %v950 = vld [vmem:[#allocation8 + $0xc8] sm:$0xff]
    %v951 = vld [vmem:[#allocation8 + $0xd0] sm:$0xff]
    %v952 = vld [vmem:[#allocation8 + $0xd8] sm:$0xff]
    %v953 = vld [vmem:[#allocation8 + $0xe0] sm:$0xff]
    %v954 = vld [vmem:[#allocation8 + $0xe8] sm:$0xff]
    %v955 = vld [vmem:[#allocation8 + $0xf0] sm:$0xff]
    %v956 = vld [vmem:[#allocation8 + $0xf8] sm:$0xff]
    %v957 = vld [vmem:[#allocation8 + $0x100] sm:$0xff]
    %v958 = vld [vmem:[#allocation8 + $0x108] sm:$0xff]
    %v959 = vld [vmem:[#allocation8 + $0x110] sm:$0xff]
    %v960 = vld [vmem:[#allocation8 + $0x118] sm:$0xff]
    %v961 = vld [vmem:[#allocation8 + $0x120] sm:$0xff]
    %v962 = vld [vmem:[#allocation8 + $0x128] sm:$0xff]
    %v963 = vld [vmem:[#allocation8 + $0x130] sm:$0xff]
    %v964 = vld [vmem:[#allocation8 + $0x138] sm:$0xff]
    %v965 = vld [vmem:[#allocation8 + $0x140] sm:$0xff]
    %v966 = vld [vmem:[#allocation8 + $0x148] sm:$0xff]
    %v967 = vld [vmem:[#allocation8 + $0x150] sm:$0xff]
    %v968 = vld [vmem:[#allocation8 + $0x158] sm:$0xff]
    %v969 = vld [vmem:[#allocation8 + $0x160] sm:$0xff]
    %v970 = vld [vmem:[#allocation8 + $0x168] sm:$0xff]
    %v971 = vld [vmem:[#allocation8 + $0x170] sm:$0xff]
    %v972 = vld [vmem:[#allocation8 + $0x178] sm:$0xff]
    %v973 = vld [vmem:[#allocation8 + $0x180] sm:$0xff]
    %v974 = vld [vmem:[#allocation8 + $0x188] sm:$0xff]
    %v975 = vld [vmem:[#allocation8 + $0x190] sm:$0xff]
    %v976 = vld [vmem:[#allocation8 + $0x198] sm:$0xff]
    %v977 = vld [vmem:[#allocation8 + $0x1a0] sm:$0xff]
    %v978 = vld [vmem:[#allocation8 + $0x1a8] sm:$0xff]
    %v979 = vld [vmem:[#allocation8 + $0x1b0] sm:$0xff]
    %v980 = vld [vmem:[#allocation8 + $0x1b8] sm:$0xff]
    %v981 = vld [vmem:[#allocation8 + $0x1c0] sm:$0xff]
    %v982 = vld [vmem:[#allocation8 + $0x1c8] sm:$0xff]
    %v983 = vld [vmem:[#allocation8 + $0x1d0] sm:$0xff]
    %v984 = vld [vmem:[#allocation8 + $0x1d8] sm:$0xff]
    %v985 = vld [vmem:[#allocation8 + $0x1e0] sm:$0xff]
    %v986 = vld [vmem:[#allocation8 + $0x1e8] sm:$0xff]
    %v987 = vld [vmem:[#allocation8 + $0x1f0] sm:$0xff]
    %v988 = vld [vmem:[#allocation8 + $0x1f8] sm:$0xff]
    %v989 = vld [vmem:[#allocation8 + $0x200] sm:$0xff]
    %v990 = vld [vmem:[#allocation8 + $0x208] sm:$0xff]
    %v991 = vld [vmem:[#allocation8 + $0x210] sm:$0xff]
    %v992 = vld [vmem:[#allocation8 + $0x218] sm:$0xff]
    %v993 = vld [vmem:[#allocation8 + $0x220] sm:$0xff]
    %v994 = vld [vmem:[#allocation8 + $0x228] sm:$0xff]
    %v995 = vld [vmem:[#allocation8 + $0x230] sm:$0xff]
    %v996 = vld [vmem:[#allocation8 + $0x238] sm:$0xff]
    %v997 = vld [vmem:[#allocation8 + $0x240] sm:$0xff]
    %v998 = vld [vmem:[#allocation8 + $0x248] sm:$0xff]
    %v999 = vld [vmem:[#allocation8 + $0x250] sm:$0xff]
    %v1000 = vld [vmem:[#allocation8 + $0x258] sm:$0xff]
    %v1001 = vld [vmem:[#allocation8 + $0x260] sm:$0xff]
    %v1002 = vld [vmem:[#allocation8 + $0x268] sm:$0xff]
    %v1003 = vld [vmem:[#allocation8 + $0x270] sm:$0xff]
    %v1004 = vld [vmem:[#allocation8 + $0x278] sm:$0xff]
    %v1005 = vld [vmem:[#allocation8 + $0x280] sm:$0xff]
    %v1006 = vld [vmem:[#allocation8 + $0x288] sm:$0xff]
    %v1007 = vld [vmem:[#allocation8 + $0x290] sm:$0xff]
    %v1008 = vld [vmem:[#allocation8 + $0x298] sm:$0xff]
    %v1009 = vld [vmem:[#allocation8 + $0x2a0] sm:$0xff]
    %v1010 = vld [vmem:[#allocation8 + $0x2a8] sm:$0xff]
    %v1011 = vld [vmem:[#allocation8 + $0x2b0] sm:$0xff]
    %v1012 = vld [vmem:[#allocation8 + $0x2b8] sm:$0xff]
    %v1013 = vld [vmem:[#allocation8 + $0x2c0] sm:$0xff]
    %v1014 = vld [vmem:[#allocation8 + $0x2c8] sm:$0xff]
    %v1015 = vld [vmem:[#allocation8 + $0x2d0] sm:$0xff]
    %v1016 = vld [vmem:[#allocation8 + $0x2d8] sm:$0xff]
    %v1017 = vld [vmem:[#allocation8 + $0x2e0] sm:$0xff]
    %v1018 = vld [vmem:[#allocation8 + $0x2e8] sm:$0xff]
    %v1019 = vld [vmem:[#allocation8 + $0x2f0] sm:$0xff]
    %v1020 = vld [vmem:[#allocation8 + $0x2f8] sm:$0xff]
    %v1021 = vld [vmem:[#allocation8 + $0x300] sm:$0xff]
    %v1022 = vld [vmem:[#allocation8 + $0x308] sm:$0xff]
    %v1023 = vld [vmem:[#allocation8 + $0x310] sm:$0xff]
    %v1024 = vld [vmem:[#allocation8 + $0x318] sm:$0xff]
    %v1025 = vld [vmem:[#allocation8 + $0x320] sm:$0xff]
    %v1026 = vld [vmem:[#allocation8 + $0x328] sm:$0xff]
    %v1027 = vld [vmem:[#allocation8 + $0x330] sm:$0xff]
    %v1028 = vld [vmem:[#allocation8 + $0x338] sm:$0xff]
    %v1029 = vld [vmem:[#allocation8 + $0x340] sm:$0xff]
    %v1030 = vld [vmem:[#allocation8 + $0x348] sm:$0xff]
    %v1031 = vld [vmem:[#allocation8 + $0x350] sm:$0xff]
    %v1032 = vld [vmem:[#allocation8 + $0x358] sm:$0xff]
    %v1033 = vld [vmem:[#allocation8 + $0x360] sm:$0xff]
    %v1034 = vld [vmem:[#allocation8 + $0x368] sm:$0xff]
    %v1035 = vld [vmem:[#allocation8 + $0x370] sm:$0xff]
    %v1036 = vld [vmem:[#allocation8 + $0x378] sm:$0xff]
    %v1037 = vld [vmem:[#allocation8 + $0x380] sm:$0xff]
    %v1038 = vld [vmem:[#allocation8 + $0x388] sm:$0xff]
    %v1039 = vld [vmem:[#allocation8 + $0x390] sm:$0xff]
    %v1040 = vld [vmem:[#allocation8 + $0x398] sm:$0xff]
    %v1041 = vld [vmem:[#allocation8 + $0x3a0] sm:$0xff]
    %v1042 = vld [vmem:[#allocation8 + $0x3a8] sm:$0xff]
    %v1043 = vld [vmem:[#allocation8 + $0x3b0] sm:$0xff]
    %v1044 = vld [vmem:[#allocation8 + $0x3b8] sm:$0xff]
    %v1045 = vld [vmem:[#allocation8 + $0x3c0] sm:$0xff]
    %v1046 = vld [vmem:[#allocation8 + $0x3c8] sm:$0xff]
    %v1047 = vld [vmem:[#allocation8 + $0x3d0] sm:$0xff]
    %v1048 = vld [vmem:[#allocation8 + $0x3d8] sm:$0xff]
    %v1049 = vld [vmem:[#allocation8 + $0x3e0] sm:$0xff]
    %v1050 = vld [vmem:[#allocation8 + $0x3e8] sm:$0xff]
    %v1051 = vld [vmem:[#allocation8 + $0x3f0] sm:$0xff]
    %v1052 = vld [vmem:[#allocation8 + $0x3f8] sm:$0xff]
    %v1053 = vld [vmem:[#allocation8 + $0x400] sm:$0xff]
    %v1054 = vld [vmem:[#allocation8 + $0x408] sm:$0xff]
    %v1055 = vld [vmem:[#allocation8 + $0x410] sm:$0xff]
    %v1056 = vld [vmem:[#allocation8 + $0x418] sm:$0xff]
    %v1057 = vld [vmem:[#allocation8 + $0x420] sm:$0xff]
    %v1058 = vld [vmem:[#allocation8 + $0x428] sm:$0xff]
    %v1059 = vld [vmem:[#allocation8 + $0x430] sm:$0xff]
    %v1060 = vld [vmem:[#allocation8 + $0x438] sm:$0xff]
    %v1061 = vld [vmem:[#allocation8 + $0x440] sm:$0xff]
    %v1062 = vld [vmem:[#allocation8 + $0x448] sm:$0xff]
    %v1063 = vld [vmem:[#allocation8 + $0x450] sm:$0xff]
    %v1064 = vld [vmem:[#allocation8 + $0x458] sm:$0xff]
    %v1065 = vld [vmem:[#allocation8 + $0x460] sm:$0xff]
    %v1066 = vld [vmem:[#allocation8 + $0x468] sm:$0xff]
    %v1067 = vld [vmem:[#allocation8 + $0x470] sm:$0xff]
    %v1068 = vld [vmem:[#allocation8 + $0x478] sm:$0xff]
    %v1069 = vld [vmem:[#allocation8 + $0x480] sm:$0xff]
    %v1070 = vld [vmem:[#allocation8 + $0x488] sm:$0xff]
    %v1071 = vld [vmem:[#allocation8 + $0x490] sm:$0xff]
    %v1072 = vld [vmem:[#allocation8 + $0x498] sm:$0xff]
    %v1073 = vld [vmem:[#allocation8 + $0x4a0] sm:$0xff]
    %v1074 = vld [vmem:[#allocation8 + $0x4a8] sm:$0xff]
    %v1075 = vld [vmem:[#allocation8 + $0x4b0] sm:$0xff]
    %v1076 = vld [vmem:[#allocation8 + $0x4b8] sm:$0xff]
    %v1077 = vld [vmem:[#allocation8 + $0x4c0] sm:$0xff]
    %v1078 = vld [vmem:[#allocation8 + $0x4c8] sm:$0xff]
    %v1079 = vld [vmem:[#allocation8 + $0x4d0] sm:$0xff]
    %v1080 = vld [vmem:[#allocation8 + $0x4d8] sm:$0xff]
    %v1081 = vld [vmem:[#allocation8 + $0x4e0] sm:$0xff]
    %v1082 = vld [vmem:[#allocation8 + $0x4e8] sm:$0xff]
    %v1083 = vld [vmem:[#allocation8 + $0x4f0] sm:$0xff]
    %v1084 = vld [vmem:[#allocation8 + $0x4f8] sm:$0xff]
    %v1085 = vld [vmem:[#allocation8 + $0x500] sm:$0xff]
    %v1086 = vld [vmem:[#allocation8 + $0x508] sm:$0xff]
    %v1087 = vld [vmem:[#allocation8 + $0x510] sm:$0xff]
    %v1088 = vld [vmem:[#allocation8 + $0x518] sm:$0xff]
    %v1089 = vld [vmem:[#allocation8 + $0x520] sm:$0xff]
    %v1090 = vld [vmem:[#allocation8 + $0x528] sm:$0xff]
    %v1091 = vld [vmem:[#allocation8 + $0x530] sm:$0xff]
    %v1092 = vld [vmem:[#allocation8 + $0x538] sm:$0xff]
    %v1093 = vld [vmem:[#allocation8 + $0x540] sm:$0xff]
    %v1094 = vld [vmem:[#allocation8 + $0x548] sm:$0xff]
    %v1095 = vld [vmem:[#allocation8 + $0x550] sm:$0xff]
    %v1096 = vld [vmem:[#allocation8 + $0x558] sm:$0xff]
    %v1097 = vld [vmem:[#allocation8 + $0x560] sm:$0xff]
    %v1098 = vld [vmem:[#allocation8 + $0x568] sm:$0xff]
    %v1099 = vld [vmem:[#allocation8 + $0x570] sm:$0xff]
    %v1100 = vld [vmem:[#allocation8 + $0x578] sm:$0xff]
    %v1101 = vld [vmem:[#allocation8 + $0x580] sm:$0xff]
    %v1102 = vld [vmem:[#allocation8 + $0x588] sm:$0xff]
    %v1103 = vld [vmem:[#allocation8 + $0x590] sm:$0xff]
    %v1104 = vld [vmem:[#allocation8 + $0x598] sm:$0xff]
    %v1105 = vld [vmem:[#allocation8 + $0x5a0] sm:$0xff]
    %v1106 = vld [vmem:[#allocation8 + $0x5a8] sm:$0xff]
    %v1107 = vld [vmem:[#allocation8 + $0x5b0] sm:$0xff]
    %v1108 = vld [vmem:[#allocation8 + $0x5b8] sm:$0xff]
    %v1109 = vld [vmem:[#allocation8 + $0x5c0] sm:$0xff]
    %v1110 = vld [vmem:[#allocation8 + $0x5c8] sm:$0xff]
    %v1111 = vld [vmem:[#allocation8 + $0x5d0] sm:$0xff]
    %v1112 = vld [vmem:[#allocation8 + $0x5d8] sm:$0xff]
    %v1113 = vld [vmem:[#allocation8 + $0x5e0] sm:$0xff]
    %v1114 = vld [vmem:[#allocation8 + $0x5e8] sm:$0xff]
    %v1115 = vld [vmem:[#allocation8 + $0x5f0] sm:$0xff]
    %v1116 = vld [vmem:[#allocation8 + $0x5f8] sm:$0xff]
    %v1117 = vld [vmem:[#allocation8 + $0x600] sm:$0xff]
    %v1118 = vld [vmem:[#allocation8 + $0x608] sm:$0xff]
    %v1119 = vld [vmem:[#allocation8 + $0x610] sm:$0xff]
    %v1120 = vld [vmem:[#allocation8 + $0x618] sm:$0xff]
    %v1121 = vld [vmem:[#allocation8 + $0x620] sm:$0xff]
    %v1122 = vld [vmem:[#allocation8 + $0x628] sm:$0xff]
    %v1123 = vld [vmem:[#allocation8 + $0x630] sm:$0xff]
    %v1124 = vld [vmem:[#allocation8 + $0x638] sm:$0xff]
    %v1125 = vld [vmem:[#allocation8 + $0x640] sm:$0xff]
    %v1126 = vld [vmem:[#allocation8 + $0x648] sm:$0xff]
    %v1127 = vld [vmem:[#allocation8 + $0x650] sm:$0xff]
    %v1128 = vld [vmem:[#allocation8 + $0x658] sm:$0xff]
    %v1129 = vld [vmem:[#allocation8 + $0x660] sm:$0xff]
    %v1130 = vld [vmem:[#allocation8 + $0x668] sm:$0xff]
    %v1131 = vld [vmem:[#allocation8 + $0x670] sm:$0xff]
    %v1132 = vld [vmem:[#allocation8 + $0x678] sm:$0xff]
    %v1133 = vld [vmem:[#allocation8 + $0x680] sm:$0xff]
    %v1134 = vld [vmem:[#allocation8 + $0x688] sm:$0xff]
    %v1135 = vld [vmem:[#allocation8 + $0x690] sm:$0xff]
    %v1136 = vld [vmem:[#allocation8 + $0x698] sm:$0xff]
    %v1137 = vld [vmem:[#allocation8 + $0x6a0] sm:$0xff]
    %v1138 = vld [vmem:[#allocation8 + $0x6a8] sm:$0xff]
    %v1139 = vld [vmem:[#allocation8 + $0x6b0] sm:$0xff]
    %v1140 = vld [vmem:[#allocation8 + $0x6b8] sm:$0xff]
    %v1141 = vld [vmem:[#allocation8 + $0x6c0] sm:$0xff]
    %v1142 = vld [vmem:[#allocation8 + $0x6c8] sm:$0xff]
    %v1143 = vld [vmem:[#allocation8 + $0x6d0] sm:$0xff]
    %v1144 = vld [vmem:[#allocation8 + $0x6d8] sm:$0xff]
    %v1145 = vld [vmem:[#allocation8 + $0x6e0] sm:$0xff]
    %v1146 = vld [vmem:[#allocation8 + $0x6e8] sm:$0xff]
    %v1147 = vld [vmem:[#allocation8 + $0x6f0] sm:$0xff]
    %v1148 = vld [vmem:[#allocation8 + $0x6f8] sm:$0xff]
    %v1149 = vld [vmem:[#allocation8 + $0x700] sm:$0xff]
    %v1150 = vld [vmem:[#allocation8 + $0x708] sm:$0xff]
    %v1151 = vld [vmem:[#allocation8 + $0x710] sm:$0xff]
    %v1152 = vld [vmem:[#allocation8 + $0x718] sm:$0xff]
    %v1153 = vld [vmem:[#allocation8 + $0x720] sm:$0xff]
    %v1154 = vld [vmem:[#allocation8 + $0x728] sm:$0xff]
    %v1155 = vld [vmem:[#allocation8 + $0x730] sm:$0xff]
    %v1156 = vld [vmem:[#allocation8 + $0x738] sm:$0xff]
    %v1157 = vld [vmem:[#allocation8 + $0x740] sm:$0xff]
    %v1158 = vld [vmem:[#allocation8 + $0x748] sm:$0xff]
    %v1159 = vld [vmem:[#allocation8 + $0x750] sm:$0xff]
    %v1160 = vld [vmem:[#allocation8 + $0x758] sm:$0xff]
    %v1161 = vld [vmem:[#allocation8 + $0x760] sm:$0xff]
    %v1162 = vld [vmem:[#allocation8 + $0x768] sm:$0xff]
    %v1163 = vld [vmem:[#allocation8 + $0x770] sm:$0xff]
    %v1164 = vld [vmem:[#allocation8 + $0x778] sm:$0xff]
    %v1165 = vld [vmem:[#allocation8 + $0x780] sm:$0xff]
    %v1166 = vld [vmem:[#allocation8 + $0x788] sm:$0xff]
    %v1167 = vld [vmem:[#allocation8 + $0x790] sm:$0xff]
    %v1168 = vld [vmem:[#allocation8 + $0x798] sm:$0xff]
    %v1169 = vld [vmem:[#allocation8 + $0x7a0] sm:$0xff]
    %v1170 = vld [vmem:[#allocation8 + $0x7a8] sm:$0xff]
    %v1171 = vld [vmem:[#allocation8 + $0x7b0] sm:$0xff]
    %v1172 = vld [vmem:[#allocation8 + $0x7b8] sm:$0xff]
    %v1173 = vld [vmem:[#allocation8 + $0x7c0] sm:$0xff]
    %v1174 = vld [vmem:[#allocation8 + $0x7c8] sm:$0xff]
    %v1175 = vld [vmem:[#allocation8 + $0x7d0] sm:$0xff]
    %v1176 = vld [vmem:[#allocation8 + $0x7d8] sm:$0xff]
    %v1177 = vld [vmem:[#allocation8 + $0x7e0] sm:$0xff]
    %v1178 = vld [vmem:[#allocation8 + $0x7e8] sm:$0xff]
    %v1179 = vld [vmem:[#allocation8 + $0x7f0] sm:$0xff]
    %v1180 = vld [vmem:[#allocation8 + $0x7f8] sm:$0xff]
    %v1181 = vld [vmem:[#allocation8 + $0x800] sm:$0xff]
    %v1182 = vld [vmem:[#allocation8 + $0x808] sm:$0xff]
    %v1183 = vld [vmem:[#allocation8 + $0x810] sm:$0xff]
    %v1184 = vld [vmem:[#allocation8 + $0x818] sm:$0xff]
    %v1185 = vld [vmem:[#allocation8 + $0x820] sm:$0xff]
    %v1186 = vld [vmem:[#allocation8 + $0x828] sm:$0xff]
    %v1187 = vld [vmem:[#allocation8 + $0x830] sm:$0xff]
    %v1188 = vld [vmem:[#allocation8 + $0x838] sm:$0xff]
    %v1189 = vld [vmem:[#allocation8 + $0x840] sm:$0xff]
    %v1190 = vld [vmem:[#allocation8 + $0x848] sm:$0xff]
    %v1191 = vld [vmem:[#allocation8 + $0x850] sm:$0xff]
    %v1192 = vld [vmem:[#allocation8 + $0x858] sm:$0xff]
    %v1193 = vld [vmem:[#allocation8 + $0x860] sm:$0xff]
    %v1194 = vld [vmem:[#allocation8 + $0x868] sm:$0xff]
    %v1195 = vld [vmem:[#allocation8 + $0x870] sm:$0xff]
    %v1196 = vld [vmem:[#allocation8 + $0x878] sm:$0xff]
    %v1197 = vld [vmem:[#allocation8 + $0x880] sm:$0xff]
    %v1198 = vld [vmem:[#allocation8 + $0x888] sm:$0xff]
    %v1199 = vld [vmem:[#allocation8 + $0x890] sm:$0xff]
    %v1200 = vld [vmem:[#allocation8 + $0x898] sm:$0xff]
    %v1201 = vld [vmem:[#allocation8 + $0x8a0] sm:$0xff]
    %v1202 = vld [vmem:[#allocation8 + $0x8a8] sm:$0xff]
    %v1203 = vld [vmem:[#allocation8 + $0x8b0] sm:$0xff]
    %v1204 = vld [vmem:[#allocation8 + $0x8b8] sm:$0xff]
    %v1205 = vld [vmem:[#allocation8 + $0x8c0] sm:$0xff]
    %v1206 = vld [vmem:[#allocation8 + $0x8c8] sm:$0xff]
    %v1207 = vld [vmem:[#allocation8 + $0x8d0] sm:$0xff]
    %v1208 = vld [vmem:[#allocation8 + $0x8d8] sm:$0xff]
    %v1209 = vld [vmem:[#allocation8 + $0x8e0] sm:$0xff]
    %v1210 = vld [vmem:[#allocation8 + $0x8e8] sm:$0xff]
    %v1211 = vld [vmem:[#allocation8 + $0x8f0] sm:$0xff]
    %v1212 = vld [vmem:[#allocation8 + $0x8f8] sm:$0xff]
    %v1213 = vld [vmem:[#allocation8 + $0x900] sm:$0xff]
    %v1214 = vld [vmem:[#allocation8 + $0x908] sm:$0xff]
    %v1215 = vld [vmem:[#allocation8 + $0x910] sm:$0xff]
    %v1216 = vld [vmem:[#allocation8 + $0x918] sm:$0xff]
    %v1217 = vld [vmem:[#allocation8 + $0x920] sm:$0xff]
    %v1218 = vld [vmem:[#allocation8 + $0x928] sm:$0xff]
    %v1219 = vld [vmem:[#allocation8 + $0x930] sm:$0xff]
    %v1220 = vld [vmem:[#allocation8 + $0x938] sm:$0xff]
    %v1221 = vld [vmem:[#allocation8 + $0x940] sm:$0xff]
    %v1222 = vld [vmem:[#allocation8 + $0x948] sm:$0xff]
    %v1223 = vld [vmem:[#allocation8 + $0x950] sm:$0xff]
    %v1224 = vld [vmem:[#allocation8 + $0x958] sm:$0xff]
    %v1225 = vld [vmem:[#allocation8 + $0x960] sm:$0xff]
    %v1226 = vld [vmem:[#allocation8 + $0x968] sm:$0xff]
    %v1227 = vld [vmem:[#allocation8 + $0x970] sm:$0xff]
    %v1228 = vld [vmem:[#allocation8 + $0x978] sm:$0xff]
    %v1229 = vld [vmem:[#allocation8 + $0x980] sm:$0xff]
    %v1230 = vld [vmem:[#allocation8 + $0x988] sm:$0xff]
    %v1231 = vld [vmem:[#allocation8 + $0x990] sm:$0xff]
    %v1232 = vld [vmem:[#allocation8 + $0x998] sm:$0xff]
    %v1233 = vld [vmem:[#allocation8 + $0x9a0] sm:$0xff]
    %v1234 = vld [vmem:[#allocation8 + $0x9a8] sm:$0xff]
    %v1235 = vld [vmem:[#allocation8 + $0x9b0] sm:$0xff]
    %v1236 = vld [vmem:[#allocation8 + $0x9b8] sm:$0xff]
    %v1237 = vld [vmem:[#allocation8 + $0x9c0] sm:$0xff]
    %v1238 = vld [vmem:[#allocation8 + $0x9c8] sm:$0xff]
    %v1239 = vld [vmem:[#allocation8 + $0x9d0] sm:$0xff]
    %v1240 = vld [vmem:[#allocation8 + $0x9d8] sm:$0xff]
    %v1241 = vld [vmem:[#allocation8 + $0x9e0] sm:$0xff]
    %v1242 = vld [vmem:[#allocation8 + $0x9e8] sm:$0xff]
    %v1243 = vld [vmem:[#allocation8 + $0x9f0] sm:$0xff]
    %v1244 = vld [vmem:[#allocation8 + $0x9f8] sm:$0xff]
    %v1245 = vld [vmem:[#allocation8 + $0xa00] sm:$0xff]
    %v1246 = vld [vmem:[#allocation8 + $0xa08] sm:$0xff]
    %v1247 = vld [vmem:[#allocation8 + $0xa10] sm:$0xff]
    %v1248 = vld [vmem:[#allocation8 + $0xa18] sm:$0xff]
    %v1249 = vld [vmem:[#allocation8 + $0xa20] sm:$0xff]
    %v1250 = vld [vmem:[#allocation8 + $0xa28] sm:$0xff]
    %v1251 = vld [vmem:[#allocation8 + $0xa30] sm:$0xff]
    %v1252 = vld [vmem:[#allocation8 + $0xa38] sm:$0xff]
    %v1253 = vld [vmem:[#allocation8 + $0xa40] sm:$0xff]
    %v1254 = vld [vmem:[#allocation8 + $0xa48] sm:$0xff]
    %v1255 = vld [vmem:[#allocation8 + $0xa50] sm:$0xff]
    %v1256 = vld [vmem:[#allocation8 + $0xa58] sm:$0xff]
    %v1257 = vld [vmem:[#allocation8 + $0xa60] sm:$0xff]
    %v1258 = vld [vmem:[#allocation8 + $0xa68] sm:$0xff]
    %v1259 = vld [vmem:[#allocation8 + $0xa70] sm:$0xff]
    %v1260 = vld [vmem:[#allocation8 + $0xa78] sm:$0xff]
    %v1261 = vld [vmem:[#allocation8 + $0xa80] sm:$0xff]
    %v1262 = vld [vmem:[#allocation8 + $0xa88] sm:$0xff]
    %v1263 = vld [vmem:[#allocation8 + $0xa90] sm:$0xff]
    %v1264 = vld [vmem:[#allocation8 + $0xa98] sm:$0xff]
    %v1265 = vld [vmem:[#allocation8 + $0xaa0] sm:$0xff]
    %v1266 = vld [vmem:[#allocation8 + $0xaa8] sm:$0xff]
    %v1267 = vld [vmem:[#allocation8 + $0xab0] sm:$0xff]
    %v1268 = vld [vmem:[#allocation8 + $0xab8] sm:$0xff]
    %v1269 = vld [vmem:[#allocation8 + $0xac0] sm:$0xff]
    %v1270 = vld [vmem:[#allocation8 + $0xac8] sm:$0xff]
    %v1271 = vld [vmem:[#allocation8 + $0xad0] sm:$0xff]
    %v1272 = vld [vmem:[#allocation8 + $0xad8] sm:$0xff]
    %v1273 = vld [vmem:[#allocation8 + $0xae0] sm:$0xff]
    %v1274 = vld [vmem:[#allocation8 + $0xae8] sm:$0xff]
    %v1275 = vld [vmem:[#allocation8 + $0xaf0] sm:$0xff]
    %v1276 = vld [vmem:[#allocation8 + $0xaf8] sm:$0xff]
    %v1277 = vld [vmem:[#allocation8 + $0xb00] sm:$0xff]
    %v1278 = vld [vmem:[#allocation8 + $0xb08] sm:$0xff]
    %v1279 = vld [vmem:[#allocation8 + $0xb10] sm:$0xff]
    %v1280 = vld [vmem:[#allocation8 + $0xb18] sm:$0xff]
    %v1281 = vld [vmem:[#allocation8 + $0xb20] sm:$0xff]
    %v1282 = vld [vmem:[#allocation8 + $0xb28] sm:$0xff]
    %v1283 = vld [vmem:[#allocation8 + $0xb30] sm:$0xff]
    %v1284 = vld [vmem:[#allocation8 + $0xb38] sm:$0xff]
    %v1285 = vld [vmem:[#allocation8 + $0xb40] sm:$0xff]
    %v1286 = vld [vmem:[#allocation8 + $0xb48] sm:$0xff]
    %v1287 = vld [vmem:[#allocation8 + $0xb50] sm:$0xff]
    %v1288 = vld [vmem:[#allocation8 + $0xb58] sm:$0xff]
    %v1289 = vld [vmem:[#allocation8 + $0xb60] sm:$0xff]
    %v1290 = vld [vmem:[#allocation8 + $0xb68] sm:$0xff]
    %v1291 = vld [vmem:[#allocation8 + $0xb70] sm:$0xff]
    %v1292 = vld [vmem:[#allocation8 + $0xb78] sm:$0xff]
    %v1293 = vld [vmem:[#allocation8 + $0xb80] sm:$0xff]
    %v1294 = vld [vmem:[#allocation8 + $0xb88] sm:$0xff]
    %v1295 = vld [vmem:[#allocation8 + $0xb90] sm:$0xff]
    %v1296 = vld [vmem:[#allocation8 + $0xb98] sm:$0xff]
    %v1297 = vld [vmem:[#allocation8 + $0xba0] sm:$0xff]
    %v1298 = vld [vmem:[#allocation8 + $0xba8] sm:$0xff]
    %v1299 = vld [vmem:[#allocation8 + $0xbb0] sm:$0xff]
    %v1300 = vld [vmem:[#allocation8 + $0xbb8] sm:$0xff]
    %v1301 = vld [vmem:[#allocation8 + $0xbc0] sm:$0xff]
    %v1302 = vld [vmem:[#allocation8 + $0xbc8] sm:$0xff]
    %v1303 = vld [vmem:[#allocation8 + $0xbd0] sm:$0xff]
    %v1304 = vld [vmem:[#allocation8 + $0xbd8] sm:$0xff]
    %v1305 = vld [vmem:[#allocation8 + $0xbe0] sm:$0xff]
    %v1306 = vld [vmem:[#allocation8 + $0xbe8] sm:$0xff]
    %v1307 = vld [vmem:[#allocation8 + $0xbf0] sm:$0xff]
    %v1308 = vld [vmem:[#allocation8 + $0xbf8] sm:$0xff]
    %v1309 = vld [vmem:[#allocation10] sm:$0x3f]
    %v1311 = vlaneseq
    %v1312 = vshrl.u32 %v1311, 7
    %v1313 = vsub.s32 0, %v1312
    %v1314 = vrot.slane %v1309, %v1313
    %v1315 = vlaneseq
    %v1316 = vshrl.u32 %v1315, 7
    %v1317 = vsub.s32 1, %v1316
    %v1318 = vrot.slane %v1309, %v1317
    %v1319 = vlaneseq
    %v1320 = vshrl.u32 %v1319, 7
    %v1321 = vsub.s32 2, %v1320
    %v1322 = vrot.slane %v1309, %v1321
    %v1323 = vlaneseq
    %v1324 = vshrl.u32 %v1323, 7
    %v1325 = vsub.s32 3, %v1324
    %v1326 = vrot.slane %v1309, %v1325
    %v1327 = vlaneseq
    %v1328 = vshrl.u32 %v1327, 7
    %v1329 = vsub.s32 4, %v1328
    %v1330 = vrot.slane %v1309, %v1329
    %v1331 = vlaneseq
    %v1332 = vshrl.u32 %v1331, 7
    %v1333 = vsub.s32 5, %v1332
    %v1334 = vrot.slane %v1309, %v1333
    %1341 = vmatprep.subr.mxu0 %v1016
    %1342 = vmatpush1.msra.mxu0 %v1015
    %1343 = vmatprep.subr.mxu0 %v1010
    %1344 = vmatpush1.msra.mxu0 %v1009
    %1345 = vmatprep.subr.mxu0 %v1004
    %1346 = vmatpush1.msra.mxu0 %v1003
    %1347 = vmatprep.subr.mxu0 %v998
    %1348 = vmatpush1.msra.mxu0 %v997
    %1349 = vmatprep.subr.mxu0 %v992
    %1350 = vmatpush1.msra.mxu0 %v991
    %1351 = vmatprep.subr.mxu0 %v986
    %1352 = vmatpush1.msra.mxu0 %v985
    %1353 = vmatprep.subr.mxu0 %v980
    %1354 = vmatpush1.msra.mxu0 %v979
    %1355 = vmatprep.subr.mxu0 %v974
    %1356 = vmatpush1.msra.mxu0 %v973
    %1357 = vmatprep.subr.mxu0 %v968
    %1358 = vmatpush1.msra.mxu0 %v967
    %1359 = vmatprep.subr.mxu0 %v962
    %1360 = vmatpush1.msra.mxu0 %v961
    %1361 = vmatprep.subr.mxu0 %v956
    %1362 = vmatpush1.msra.mxu0 %v955
    %1363 = vmatprep.subr.mxu0 %v950
    %1364 = vmatpush1.msra.mxu0 %v949
    %1365 = vmatprep.subr.mxu0 %v944
    %1366 = vmatpush1.msra.mxu0 %v943
    %1367 = vmatprep.subr.mxu0 %v938
    %1368 = vmatpush1.msra.mxu0 %v937
    %1369 = vmatprep.subr.mxu0 %v932
    %1370 = vmatpush1.msra.mxu0 %v931
    %1371 = vmatprep.subr.mxu0 %v926
    %1372 = vmatpush1.msra.mxu0 %v925
    %1373 = vmatprep.subr.mxu0 %v1112
    %1374 = vmatpush2.msra.mxu0 %v1111
    %1375 = vmatprep.subr.mxu0 %v1106
    %1376 = vmatpush2.msra.mxu0 %v1105
    %1377 = vmatprep.subr.mxu0 %v1100
    %1378 = vmatpush2.msra.mxu0 %v1099
    %1379 = vmatprep.subr.mxu0 %v1094
    %1380 = vmatpush2.msra.mxu0 %v1093
    %1381 = vmatprep.subr.mxu0 %v1088
    %1382 = vmatpush2.msra.mxu0 %v1087
    %1383 = vmatprep.subr.mxu0 %v1082
    %1384 = vmatpush2.msra.mxu0 %v1081
    %1385 = vmatprep.subr.mxu0 %v1076
    %1386 = vmatpush2.msra.mxu0 %v1075
    %1387 = vmatprep.subr.mxu0 %v1070
    %1388 = vmatpush2.msra.mxu0 %v1069
    %1389 = vmatprep.subr.mxu0 %v1064
    %1390 = vmatpush2.msra.mxu0 %v1063
    %1391 = vmatprep.subr.mxu0 %v1058
    %1392 = vmatpush2.msra.mxu0 %v1057
    %1393 = vmatprep.subr.mxu0 %v1052
    %1394 = vmatpush2.msra.mxu0 %v1051
    %1395 = vmatprep.subr.mxu0 %v1046
    %1396 = vmatpush2.msra.mxu0 %v1045
    %1397 = vmatprep.subr.mxu0 %v1040
    %1398 = vmatpush2.msra.mxu0 %v1039
    %1399 = vmatprep.subr.mxu0 %v1034
    %1400 = vmatpush2.msra.mxu0 %v1033
    %1401 = vmatprep.subr.mxu0 %v1028
    %1402 = vmatpush2.msra.mxu0 %v1027
    %1403 = vmatprep.subr.mxu0 %v1022
    %1404 = vmatpush2.msra.mxu0 %v1021
    %1405 = vmatprep.mubr.f32.mxu0 %v922
    %1406 = vmatmul.mubr.f32.gmra.mxu0 %v921
    %v1407 = vpop.f32.mrf.mxu0
    %v1408 = vadd.f32 %v1314, %v1407
    %v1409 = vpop.f32.mrf.mxu0
    %v1410 = vadd.f32 %v1318, %v1409
    %1411 = vdwg.mxu0
    %1412 = vmatprep.subr.mxu0 %v1208
    %1413 = vmatpush1.msra.mxu0 %v1207
    %1414 = vmatprep.subr.mxu0 %v1202
    %1415 = vmatpush1.msra.mxu0 %v1201
    %1416 = vmatprep.subr.mxu0 %v1196
    %1417 = vmatpush1.msra.mxu0 %v1195
    %1418 = vmatprep.subr.mxu0 %v1190
    %1419 = vmatpush1.msra.mxu0 %v1189
    %1420 = vmatprep.subr.mxu0 %v1184
    %1421 = vmatpush1.msra.mxu0 %v1183
    %1422 = vmatprep.subr.mxu0 %v1178
    %1423 = vmatpush1.msra.mxu0 %v1177
    %1424 = vmatprep.subr.mxu0 %v1172
    %1425 = vmatpush1.msra.mxu0 %v1171
    %1426 = vmatprep.subr.mxu0 %v1166
    %1427 = vmatpush1.msra.mxu0 %v1165
    %1428 = vmatprep.subr.mxu0 %v1160
    %1429 = vmatpush1.msra.mxu0 %v1159
    %1430 = vmatprep.subr.mxu0 %v1154
    %1431 = vmatpush1.msra.mxu0 %v1153
    %1432 = vmatprep.subr.mxu0 %v1148
    %1433 = vmatpush1.msra.mxu0 %v1147
    %1434 = vmatprep.subr.mxu0 %v1142
    %1435 = vmatpush1.msra.mxu0 %v1141
    %1436 = vmatprep.subr.mxu0 %v1136
    %1437 = vmatpush1.msra.mxu0 %v1135
    %1438 = vmatprep.subr.mxu0 %v1130
    %1439 = vmatpush1.msra.mxu0 %v1129
    %1440 = vmatprep.subr.mxu0 %v1124
    %1441 = vmatpush1.msra.mxu0 %v1123
    %1442 = vmatprep.subr.mxu0 %v1118
    %1443 = vmatpush1.msra.mxu0 %v1117
    %1444 = vmatprep.subr.mxu0 %v1304
    %1445 = vmatpush2.msra.mxu0 %v1303
    %1446 = vmatprep.subr.mxu0 %v1298
    %1447 = vmatpush2.msra.mxu0 %v1297
    %1448 = vmatprep.subr.mxu0 %v1292
    %1449 = vmatpush2.msra.mxu0 %v1291
    %1450 = vmatprep.subr.mxu0 %v1286
    %1451 = vmatpush2.msra.mxu0 %v1285
    %1452 = vmatprep.subr.mxu0 %v1280
    %1453 = vmatpush2.msra.mxu0 %v1279
    %1454 = vmatprep.subr.mxu0 %v1274
    %1455 = vmatpush2.msra.mxu0 %v1273
    %1456 = vmatprep.subr.mxu0 %v1268
    %1457 = vmatpush2.msra.mxu0 %v1267
    %1458 = vmatprep.subr.mxu0 %v1262
    %1459 = vmatpush2.msra.mxu0 %v1261
    %1460 = vmatprep.subr.mxu0 %v1256
    %1461 = vmatpush2.msra.mxu0 %v1255
    %1462 = vmatprep.subr.mxu0 %v1250
    %1463 = vmatpush2.msra.mxu0 %v1249
    %1464 = vmatprep.subr.mxu0 %v1244
    %1465 = vmatpush2.msra.mxu0 %v1243
    %1466 = vmatprep.subr.mxu0 %v1238
    %1467 = vmatpush2.msra.mxu0 %v1237
    %1468 = vmatprep.subr.mxu0 %v1232
    %1469 = vmatpush2.msra.mxu0 %v1231
    %1470 = vmatprep.subr.mxu0 %v1226
    %1471 = vmatpush2.msra.mxu0 %v1225
    %1472 = vmatprep.subr.mxu0 %v1220
    %1473 = vmatpush2.msra.mxu0 %v1219
    %1474 = vmatprep.subr.mxu0 %v1214
    %1475 = vmatpush2.msra.mxu0 %v1213
    %1476 = vmatprep.mubr.f32.mxu0 %v924
    %1477 = vmatmul.mubr.f32.gmra.mxu0 %v923
    %v1478 = vpop.f32.mrf.mxu0
    %v1479 = vadd.f32 %v1408, %v1478
    %v1480 = vpop.f32.mrf.mxu0
    %v1481 = vadd.f32 %v1410, %v1480
    %1482 = vdwg.mxu0
    %1483 = vmatprep.subr.mxu0 %v1018
    %1484 = vmatpush1.msra.mxu0 %v1017
    %1485 = vmatprep.subr.mxu0 %v1012
    %1486 = vmatpush1.msra.mxu0 %v1011
    %1487 = vmatprep.subr.mxu0 %v1006
    %1488 = vmatpush1.msra.mxu0 %v1005
    %1489 = vmatprep.subr.mxu0 %v1000
    %1490 = vmatpush1.msra.mxu0 %v999
    %1491 = vmatprep.subr.mxu0 %v994
    %1492 = vmatpush1.msra.mxu0 %v993
    %1493 = vmatprep.subr.mxu0 %v988
    %1494 = vmatpush1.msra.mxu0 %v987
    %1495 = vmatprep.subr.mxu0 %v982
    %1496 = vmatpush1.msra.mxu0 %v981
    %1497 = vmatprep.subr.mxu0 %v976
    %1498 = vmatpush1.msra.mxu0 %v975
    %1499 = vmatprep.subr.mxu0 %v970
    %1500 = vmatpush1.msra.mxu0 %v969
    %1501 = vmatprep.subr.mxu0 %v964
    %1502 = vmatpush1.msra.mxu0 %v963
    %1503 = vmatprep.subr.mxu0 %v958
    %1504 = vmatpush1.msra.mxu0 %v957
    %1505 = vmatprep.subr.mxu0 %v952
    %1506 = vmatpush1.msra.mxu0 %v951
    %1507 = vmatprep.subr.mxu0 %v946
    %1508 = vmatpush1.msra.mxu0 %v945
    %1509 = vmatprep.subr.mxu0 %v940
    %1510 = vmatpush1.msra.mxu0 %v939
    %1511 = vmatprep.subr.mxu0 %v934
    %1512 = vmatpush1.msra.mxu0 %v933
    %1513 = vmatprep.subr.mxu0 %v928
    %1514 = vmatpush1.msra.mxu0 %v927
    %1515 = vmatprep.subr.mxu0 %v1114
    %1516 = vmatpush2.msra.mxu0 %v1113
    %1517 = vmatprep.subr.mxu0 %v1108
    %1518 = vmatpush2.msra.mxu0 %v1107
    %1519 = vmatprep.subr.mxu0 %v1102
    %1520 = vmatpush2.msra.mxu0 %v1101
    %1521 = vmatprep.subr.mxu0 %v1096
    %1522 = vmatpush2.msra.mxu0 %v1095
    %1523 = vmatprep.subr.mxu0 %v1090
    %1524 = vmatpush2.msra.mxu0 %v1089
    %1525 = vmatprep.subr.mxu0 %v1084
    %1526 = vmatpush2.msra.mxu0 %v1083
    %1527 = vmatprep.subr.mxu0 %v1078
    %1528 = vmatpush2.msra.mxu0 %v1077
    %1529 = vmatprep.subr.mxu0 %v1072
    %1530 = vmatpush2.msra.mxu0 %v1071
    %1531 = vmatprep.subr.mxu0 %v1066
    %1532 = vmatpush2.msra.mxu0 %v1065
    %1533 = vmatprep.subr.mxu0 %v1060
    %1534 = vmatpush2.msra.mxu0 %v1059
    %1535 = vmatprep.subr.mxu0 %v1054
    %1536 = vmatpush2.msra.mxu0 %v1053
    %1537 = vmatprep.subr.mxu0 %v1048
    %1538 = vmatpush2.msra.mxu0 %v1047
    %1539 = vmatprep.subr.mxu0 %v1042
    %1540 = vmatpush2.msra.mxu0 %v1041
    %1541 = vmatprep.subr.mxu0 %v1036
    %1542 = vmatpush2.msra.mxu0 %v1035
    %1543 = vmatprep.subr.mxu0 %v1030
    %1544 = vmatpush2.msra.mxu0 %v1029
    %1545 = vmatprep.subr.mxu0 %v1024
    %1546 = vmatpush2.msra.mxu0 %v1023
    %1547 = vmatprep.mubr.f32.mxu0 %v922
    %1548 = vmatmul.mubr.f32.gmra.mxu0 %v921
    %v1549 = vpop.f32.mrf.mxu0
    %v1550 = vadd.f32 %v1322, %v1549
    %v1551 = vpop.f32.mrf.mxu0
    %v1552 = vadd.f32 %v1326, %v1551
    %1553 = vdwg.mxu0
    %1554 = vmatprep.subr.mxu0 %v1210
    %1555 = vmatpush1.msra.mxu0 %v1209
    %1556 = vmatprep.subr.mxu0 %v1204
    %1557 = vmatpush1.msra.mxu0 %v1203
    %1558 = vmatprep.subr.mxu0 %v1198
    %1559 = vmatpush1.msra.mxu0 %v1197
    %1560 = vmatprep.subr.mxu0 %v1192
    %1561 = vmatpush1.msra.mxu0 %v1191
    %1562 = vmatprep.subr.mxu0 %v1186
    %1563 = vmatpush1.msra.mxu0 %v1185
    %1564 = vmatprep.subr.mxu0 %v1180
    %1565 = vmatpush1.msra.mxu0 %v1179
    %1566 = vmatprep.subr.mxu0 %v1174
    %1567 = vmatpush1.msra.mxu0 %v1173
    %1568 = vmatprep.subr.mxu0 %v1168
    %1569 = vmatpush1.msra.mxu0 %v1167
    %1570 = vmatprep.subr.mxu0 %v1162
    %1571 = vmatpush1.msra.mxu0 %v1161
    %1572 = vmatprep.subr.mxu0 %v1156
    %1573 = vmatpush1.msra.mxu0 %v1155
    %1574 = vmatprep.subr.mxu0 %v1150
    %1575 = vmatpush1.msra.mxu0 %v1149
    %1576 = vmatprep.subr.mxu0 %v1144
    %1577 = vmatpush1.msra.mxu0 %v1143
    %1578 = vmatprep.subr.mxu0 %v1138
    %1579 = vmatpush1.msra.mxu0 %v1137
    %1580 = vmatprep.subr.mxu0 %v1132
    %1581 = vmatpush1.msra.mxu0 %v1131
    %1582 = vmatprep.subr.mxu0 %v1126
    %1583 = vmatpush1.msra.mxu0 %v1125
    %1584 = vmatprep.subr.mxu0 %v1120
    %1585 = vmatpush1.msra.mxu0 %v1119
    %1586 = vmatprep.subr.mxu0 %v1306
    %1587 = vmatpush2.msra.mxu0 %v1305
    %1588 = vmatprep.subr.mxu0 %v1300
    %1589 = vmatpush2.msra.mxu0 %v1299
    %1590 = vmatprep.subr.mxu0 %v1294
    %1591 = vmatpush2.msra.mxu0 %v1293
    %1592 = vmatprep.subr.mxu0 %v1288
    %1593 = vmatpush2.msra.mxu0 %v1287
    %1594 = vmatprep.subr.mxu0 %v1282
    %1595 = vmatpush2.msra.mxu0 %v1281
    %1596 = vmatprep.subr.mxu0 %v1276
    %1597 = vmatpush2.msra.mxu0 %v1275
    %1598 = vmatprep.subr.mxu0 %v1270
    %1599 = vmatpush2.msra.mxu0 %v1269
    %1600 = vmatprep.subr.mxu0 %v1264
    %1601 = vmatpush2.msra.mxu0 %v1263
    %1602 = vmatprep.subr.mxu0 %v1258
    %1603 = vmatpush2.msra.mxu0 %v1257
    %1604 = vmatprep.subr.mxu0 %v1252
    %1605 = vmatpush2.msra.mxu0 %v1251
    %1606 = vmatprep.subr.mxu0 %v1246
    %1607 = vmatpush2.msra.mxu0 %v1245
    %1608 = vmatprep.subr.mxu0 %v1240
    %1609 = vmatpush2.msra.mxu0 %v1239
    %1610 = vmatprep.subr.mxu0 %v1234
    %1611 = vmatpush2.msra.mxu0 %v1233
    %1612 = vmatprep.subr.mxu0 %v1228
    %1613 = vmatpush2.msra.mxu0 %v1227
    %1614 = vmatprep.subr.mxu0 %v1222
    %1615 = vmatpush2.msra.mxu0 %v1221
    %1616 = vmatprep.subr.mxu0 %v1216
    %1617 = vmatpush2.msra.mxu0 %v1215
    %1618 = vmatprep.mubr.f32.mxu0 %v924
    %1619 = vmatmul.mubr.f32.gmra.mxu0 %v923
    %v1620 = vpop.f32.mrf.mxu0
    %v1621 = vadd.f32 %v1550, %v1620
    %v1622 = vpop.f32.mrf.mxu0
    %v1623 = vadd.f32 %v1552, %v1622
    %1624 = vdwg.mxu0
    %1625 = vmatprep.subr.mxu0 %v1020
    %1626 = vmatpush1.msra.mxu0 %v1019
    %1627 = vmatprep.subr.mxu0 %v1014
    %1628 = vmatpush1.msra.mxu0 %v1013
    %1629 = vmatprep.subr.mxu0 %v1008
    %1630 = vmatpush1.msra.mxu0 %v1007
    %1631 = vmatprep.subr.mxu0 %v1002
    %1632 = vmatpush1.msra.mxu0 %v1001
    %1633 = vmatprep.subr.mxu0 %v996
    %1634 = vmatpush1.msra.mxu0 %v995
    %1635 = vmatprep.subr.mxu0 %v990
    %1636 = vmatpush1.msra.mxu0 %v989
    %1637 = vmatprep.subr.mxu0 %v984
    %1638 = vmatpush1.msra.mxu0 %v983
    %1639 = vmatprep.subr.mxu0 %v978
    %1640 = vmatpush1.msra.mxu0 %v977
    %1641 = vmatprep.subr.mxu0 %v972
    %1642 = vmatpush1.msra.mxu0 %v971
    %1643 = vmatprep.subr.mxu0 %v966
    %1644 = vmatpush1.msra.mxu0 %v965
    %1645 = vmatprep.subr.mxu0 %v960
    %1646 = vmatpush1.msra.mxu0 %v959
    %1647 = vmatprep.subr.mxu0 %v954
    %1648 = vmatpush1.msra.mxu0 %v953
    %1649 = vmatprep.subr.mxu0 %v948
    %1650 = vmatpush1.msra.mxu0 %v947
    %1651 = vmatprep.subr.mxu0 %v942
    %1652 = vmatpush1.msra.mxu0 %v941
    %1653 = vmatprep.subr.mxu0 %v936
    %1654 = vmatpush1.msra.mxu0 %v935
    %1655 = vmatprep.subr.mxu0 %v930
    %1656 = vmatpush1.msra.mxu0 %v929
    %1657 = vmatprep.subr.mxu0 %v1116
    %1658 = vmatpush2.msra.mxu0 %v1115
    %1659 = vmatprep.subr.mxu0 %v1110
    %1660 = vmatpush2.msra.mxu0 %v1109
    %1661 = vmatprep.subr.mxu0 %v1104
    %1662 = vmatpush2.msra.mxu0 %v1103
    %1663 = vmatprep.subr.mxu0 %v1098
    %1664 = vmatpush2.msra.mxu0 %v1097
    %1665 = vmatprep.subr.mxu0 %v1092
    %1666 = vmatpush2.msra.mxu0 %v1091
    %1667 = vmatprep.subr.mxu0 %v1086
    %1668 = vmatpush2.msra.mxu0 %v1085
    %1669 = vmatprep.subr.mxu0 %v1080
    %1670 = vmatpush2.msra.mxu0 %v1079
    %1671 = vmatprep.subr.mxu0 %v1074
    %1672 = vmatpush2.msra.mxu0 %v1073
    %1673 = vmatprep.subr.mxu0 %v1068
    %1674 = vmatpush2.msra.mxu0 %v1067
    %1675 = vmatprep.subr.mxu0 %v1062
    %1676 = vmatpush2.msra.mxu0 %v1061
    %1677 = vmatprep.subr.mxu0 %v1056
    %1678 = vmatpush2.msra.mxu0 %v1055
    %1679 = vmatprep.subr.mxu0 %v1050
    %1680 = vmatpush2.msra.mxu0 %v1049
    %1681 = vmatprep.subr.mxu0 %v1044
    %1682 = vmatpush2.msra.mxu0 %v1043
    %1683 = vmatprep.subr.mxu0 %v1038
    %1684 = vmatpush2.msra.mxu0 %v1037
    %1685 = vmatprep.subr.mxu0 %v1032
    %1686 = vmatpush2.msra.mxu0 %v1031
    %1687 = vmatprep.subr.mxu0 %v1026
    %1688 = vmatpush2.msra.mxu0 %v1025
    %1689 = vmatprep.mubr.f32.mxu0 %v922
    %1690 = vmatmul.mubr.f32.gmra.mxu0 %v921
    %v1691 = vpop.f32.mrf.mxu0
    %v1692 = vadd.f32 %v1330, %v1691
    %v1693 = vpop.f32.mrf.mxu0
    %v1694 = vadd.f32 %v1334, %v1693
    %1695 = vdwg.mxu0
    %1696 = vmatprep.subr.mxu0 %v1212
    %1697 = vmatpush1.msra.mxu0 %v1211
    %1698 = vmatprep.subr.mxu0 %v1206
    %1699 = vmatpush1.msra.mxu0 %v1205
    %1700 = vmatprep.subr.mxu0 %v1200
    %1701 = vmatpush1.msra.mxu0 %v1199
    %1702 = vmatprep.subr.mxu0 %v1194
    %1703 = vmatpush1.msra.mxu0 %v1193
    %1704 = vmatprep.subr.mxu0 %v1188
    %1705 = vmatpush1.msra.mxu0 %v1187
    %1706 = vmatprep.subr.mxu0 %v1182
    %1707 = vmatpush1.msra.mxu0 %v1181
    %1708 = vmatprep.subr.mxu0 %v1176
    %1709 = vmatpush1.msra.mxu0 %v1175
    %1710 = vmatprep.subr.mxu0 %v1170
    %1711 = vmatpush1.msra.mxu0 %v1169
    %1712 = vmatprep.subr.mxu0 %v1164
    %1713 = vmatpush1.msra.mxu0 %v1163
    %1714 = vmatprep.subr.mxu0 %v1158
    %1715 = vmatpush1.msra.mxu0 %v1157
    %1716 = vmatprep.subr.mxu0 %v1152
    %1717 = vmatpush1.msra.mxu0 %v1151
    %1718 = vmatprep.subr.mxu0 %v1146
    %1719 = vmatpush1.msra.mxu0 %v1145
    %1720 = vmatprep.subr.mxu0 %v1140
    %1721 = vmatpush1.msra.mxu0 %v1139
    %1722 = vmatprep.subr.mxu0 %v1134
    %1723 = vmatpush1.msra.mxu0 %v1133
    %1724 = vmatprep.subr.mxu0 %v1128
    %1725 = vmatpush1.msra.mxu0 %v1127
    %1726 = vmatprep.subr.mxu0 %v1122
    %1727 = vmatpush1.msra.mxu0 %v1121
    %1728 = vmatprep.subr.mxu0 %v1308
    %1729 = vmatpush2.msra.mxu0 %v1307
    %1730 = vmatprep.subr.mxu0 %v1302
    %1731 = vmatpush2.msra.mxu0 %v1301
    %1732 = vmatprep.subr.mxu0 %v1296
    %1733 = vmatpush2.msra.mxu0 %v1295
    %1734 = vmatprep.subr.mxu0 %v1290
    %1735 = vmatpush2.msra.mxu0 %v1289
    %1736 = vmatprep.subr.mxu0 %v1284
    %1737 = vmatpush2.msra.mxu0 %v1283
    %1738 = vmatprep.subr.mxu0 %v1278
    %1739 = vmatpush2.msra.mxu0 %v1277
    %1740 = vmatprep.subr.mxu0 %v1272
    %1741 = vmatpush2.msra.mxu0 %v1271
    %1742 = vmatprep.subr.mxu0 %v1266
    %1743 = vmatpush2.msra.mxu0 %v1265
    %1744 = vmatprep.subr.mxu0 %v1260
    %1745 = vmatpush2.msra.mxu0 %v1259
    %1746 = vmatprep.subr.mxu0 %v1254
    %1747 = vmatpush2.msra.mxu0 %v1253
    %1748 = vmatprep.subr.mxu0 %v1248
    %1749 = vmatpush2.msra.mxu0 %v1247
    %1750 = vmatprep.subr.mxu0 %v1242
    %1751 = vmatpush2.msra.mxu0 %v1241
    %1752 = vmatprep.subr.mxu0 %v1236
    %1753 = vmatpush2.msra.mxu0 %v1235
    %1754 = vmatprep.subr.mxu0 %v1230
    %1755 = vmatpush2.msra.mxu0 %v1229
    %1756 = vmatprep.subr.mxu0 %v1224
    %1757 = vmatpush2.msra.mxu0 %v1223
    %1758 = vmatprep.subr.mxu0 %v1218
    %1759 = vmatpush2.msra.mxu0 %v1217
    %1760 = vmatprep.mubr.f32.mxu0 %v924
    %1761 = vmatmul.mubr.f32.gmra.mxu0 %v923
    %v1762 = vpop.f32.mrf.mxu0
    %v1763 = vadd.f32 %v1692, %v1762
    %v1764 = vpop.f32.mrf.mxu0
    %v1765 = vadd.f32 %v1694, %v1764
    %1766 = vdwg.mxu0
    %v1767 = vmul.f32 %v1479, %v1479
    %v1768 = vmul.f32 %v1481, %v1481
    %v1769 = vmul.f32 %v1621, %v1621
    %v1770 = vmul.f32 %v1623, %v1623
    %v1771 = vmul.f32 %v1763, %v1763
    %v1772 = vmul.f32 %v1765, %v1765
    %v1773 = vadd.f32 %v1767, %v1768
    %v1774 = vadd.f32 %v1773, %v1769
    %v1775 = vadd.f32 %v1774, %v1770
    %v1776 = vadd.f32 %v1775, %v1771
    %v1777 = vadd.f32 %v1776, %v1772
    %1778 = vadd.xlane.f32.xlu0 %v1777
    %v1779 = vpop.xlane.xlu0 %1778
    %v1780 = vmax.f32 %v1779, 1e-24
    %v1781 = vrsqrt.pop %v1780
    %v1782 = vmul.f32 %v1479, %v1781
    %v1783 = vmul.f32 %v1481, %v1781
    %v1784 = vmul.f32 %v1621, %v1781
    %v1785 = vmul.f32 %v1623, %v1781
    %v1786 = vmul.f32 %v1763, %v1781
    %v1787 = vmul.f32 %v1765, %v1781
    %v1788 = vpack.c.bf16 %v1782, %v1782
    %v1789 = vpack.c.bf16 %v1783, %v1783
    %v1790 = vpack.c.bf16 %v1784, %v1784
    %v1791 = vpack.c.bf16 %v1785, %v1785
    %v1792 = vpack.c.bf16 %v1786, %v1786
    %v1793 = vpack.c.bf16 %v1787, %v1787
    %v1800 = vunpack.c.l.b16 %v1788
    %v1801 = vunpack.c.l.b16 %v1789
    %v1802 = vunpack.c.l.b16 %v1790
    %v1803 = vunpack.c.l.b16 %v1791
    %v1804 = vunpack.c.l.b16 %v1792
    %v1805 = vunpack.c.l.b16 %v1793
    %v1806 = vpack.c.b16 %v1801, %v1800
    %v1807 = vpack.c.b16 %v1803, %v1802
    %v1808 = vpack.c.b16 %v1805, %v1804
    %1812 = vst [vmem:[#allocation11] sm:$0xff] %v1806
    %1813 = vst [vmem:[#allocation11 + $0x8] sm:$0xff] %v1807
    %1814 = vst [vmem:[#allocation11 + $0x10] sm:$0xff] %v1808
    // Predicated region
    $region42: #{tpu_custom_call.1} parent=1 // pred_check
      _
    $region43: #{tpu_custom_call.1} parent=1 // pred_check_branch
      %1816 = sbr.rel (0) target = $region45
    $region44: #{tpu_custom_call.1} parent=1 // pred_region
      %s1818 = ssub.s32 384, 384
      %1819 = vsyncadd [#allocation4], %s1818
      %s1821 = sshll.u32 [#allocation11], 4
      %s1822 = int_to_ptr.vmem [resolvable:$true] %s1821
      %1824 = dma.vmem_to_hbm [thread:$0]  %s1822, 384, %s5, [#allocation4]
    $region45: #{tpu_custom_call.1} parent=1 // pred_fallthru
      _
    // Predicated region
    $region46: #{tpu_custom_call.1} parent=1 // pred_check
      _
    $region47: #{tpu_custom_call.1} parent=1 // pred_check_branch
      %1826 = sbr.rel (0) target = $region49
    $region48: #{tpu_custom_call.1} parent=1 // pred_region
      %1827 = dma.done [#allocation4], 384
    $region49: #{tpu_custom_call.1} parent=1 // pred_fallthru
      _
    %1828 = vsyncpa [#allocation3], 1
    %1829 = vsyncpa [#allocation6], 1
    %1830 = vsyncpa [#allocation9], 1
    %1831 = vsyncpa [#allocation4], 1

</llo_original>
